<compile_context>
chip_gen: v7x
topology: tpu7x:2x2x1
jax: 0.10.0
libtpu: 0.0.40
codegen_flags: <defaults>
</compile_context>

<pallas_src>
import jax
import jax.numpy as jnp
from jax import lax
from jax.experimental import pallas as pl
from jax.experimental.pallas import tpu as pltpu


def dec_kernel(x_ref, w1_ref, b1_ref, w2_ref, b2_ref, neg2c_ref, csq_ref,
               zT_ref, qT_ref):
    # ---- encoder: Linear -> ReLU -> Linear, transposed (lane = batch) ----
    # h^T = W1 @ x^T : contract D against D directly (x arrives row-major,
    # no wrapper transpose); bf16 MXU operands, f32 accumulation.
    hT = lax.dot_general(w1_ref[...], x_ref[...],
                         dimension_numbers=(((1,), (1,)), ((), ())),
                         preferred_element_type=jnp.float32)        # (H, TN)
    hT = jnp.maximum(hT + b1_ref[...], 0.0)                          # f32 VPU
    zT = jnp.dot(w2_ref[...], hT.astype(jnp.bfloat16),
                 preferred_element_type=jnp.float32)                 # (L, TN)
    zT = zT + b2_ref[...]
    zT_ref[...] = zT

    # ---- Student-t soft assignment, (K, TN) lane-dense ----
    z_sq = jnp.sum(zT * zT, axis=0, keepdims=True)                   # (1, TN)
    cross = jnp.dot(neg2c_ref[...], zT.astype(jnp.bfloat16),
                    preferred_element_type=jnp.float32)              # (K, TN)
    dist = jnp.maximum(csq_ref[...] + z_sq + cross, 0.0)             # ||z-c||^2
    t = pl.reciprocal(1.0 + dist, approx=True)                       # 1/(1+dist)
    q = t * jnp.sqrt(t)                                              # t ** 1.5
    q_sum = jnp.sum(q, axis=0, keepdims=True)                        # (1, TN)
    qT_ref[...] = q * pl.reciprocal(q_sum)                           # exact norm


def dec_forward(x, w1, b1, w2, b2, clusters, *, tn=512):
    """DEC forward.  x: (N, D); w1: (H, D), b1: (H,), w2: (L, H), b2: (L,) in
    PyTorch nn.Linear (out, in) layout; clusters: (K, L).
    Returns z: (N, L) and q: (N, K), both float32."""
    n, d = x.shape
    h = w1.shape[0]
    l = w2.shape[0]
    k = clusters.shape[0]

    # Keep at least two grid steps so v7x's two TensorCores both get work;
    # floor at 128 so output stores stay full-lane-width.
    while tn > 128 and pl.cdiv(n, tn) < 2:
        tn //= 2
    n_tiles = pl.cdiv(n, tn)
    n_pad = n_tiles * tn

    # Wrapper-side constant precompute.  MXU operands in bf16 (accumulation in
    # f32 inside the kernel); biases / centroid norms stay f32 for the VPU/EUP.
    x_bf = jnp.pad(x.astype(jnp.float32),
                   ((0, n_pad - n), (0, 0))).astype(jnp.bfloat16)    # (Npad, D)
    w1_bf = w1.astype(jnp.bfloat16)                                  # (H, D)
    w2_bf = w2.astype(jnp.bfloat16)                                  # (L, H)
    b1c = b1.reshape(h, 1).astype(jnp.float32)
    b2c = b2.reshape(l, 1).astype(jnp.float32)
    cl = clusters.astype(jnp.float32)
    neg2c = (-2.0 * cl).astype(jnp.bfloat16)                         # (K, L)
    c_sq = jnp.sum(cl * cl, axis=1, keepdims=True)                   # (K, 1)

    const_shapes = [(h, d), (h, 1), (l, h), (l, 1), (k, l), (k, 1)]

    def build(single_buffer_consts):
        if single_buffer_consts:
            const = [pl.BlockSpec(s, lambda i: (0, 0),
                                  pipeline_mode=pl.Buffered(1))
                     for s in const_shapes]
        else:
            const = [pl.BlockSpec(s, lambda i: (0, 0)) for s in const_shapes]
        return pl.pallas_call(
            dec_kernel,
            out_shape=(
                jax.ShapeDtypeStruct((l, n_pad), jnp.float32),       # z^T
                jax.ShapeDtypeStruct((k, n_pad), jnp.float32),       # q^T
            ),
            grid=(n_tiles,),
            in_specs=[pl.BlockSpec((tn, d), lambda i: (i, 0))] + const,
            out_specs=(
                pl.BlockSpec((l, tn), lambda i: (0, i)),
                pl.BlockSpec((k, tn), lambda i: (0, i)),
            ),
            compiler_params=pltpu.CompilerParams(
                dimension_semantics=("parallel",),
                vmem_limit_bytes=48 * 1024 * 1024,   # headroom under v7x 64MiB
            ),
        )

    args = (x_bf, w1_bf, b1c, w2_bf, b2c, neg2c, c_sq)
    try:
        # Constant operands single-buffered: halves W1/W2/centroid VMEM use.
        z_t, q_t = build(True)(*args)
    except Exception:
        # TODO(synk): this JAX build rejected pipeline_mode=pl.Buffered(1);
        # fall back to default (double-buffered) constant blocks.
        z_t, q_t = build(False)(*args)

    return z_t[:, :n].T, q_t[:, :n].T


if __name__ == "__main__":
    # Small shapes consistent with the module: batch N, input D, hidden H,
    # latent L (= encoder[-1].out_features), n_clusters K = 10.
    N, D, H, L, K = 200, 64, 32, 16, 10   # N not a tile multiple -> padding path

    key = jax.random.PRNGKey(0)
    kx, k1, k2, k3, k4, kc = jax.random.split(key, 6)

    def xavier_normal(k_, shape):          # (out, in), like nn.init.xavier_normal_
        fan_out, fan_in = shape
        std = (2.0 / (fan_in + fan_out)) ** 0.5
        return std * jax.random.normal(k_, shape, dtype=jnp.float32)

    x = jax.random.normal(kx, (N, D), dtype=jnp.float32)
    w1 = xavier_normal(k1, (H, D))         # PyTorch Linear weight layout (out, in)
    b1 = 0.01 * jax.random.normal(k2, (H,), dtype=jnp.float32)
    w2 = xavier_normal(k3, (L, H))
    b2 = 0.01 * jax.random.normal(k4, (L,), dtype=jnp.float32)
    clusters = xavier_normal(kc, (K, L))   # nn.init.xavier_normal_ on (K, L)

    # Default tn=512 auto-shrinks to 128 here so the grid still has 2 steps.
    z, q = dec_forward(x, w1, b1, w2, b2, clusters)
    jax.block_until_ready((z, q))

    # Pure-numpy reference of the PyTorch forward.
    import numpy as np
    xn, w1n, b1n, w2n, b2n, cn = (np.asarray(a, np.float32)
                                  for a in (x, w1, b1, w2, b2, clusters))
    hn = np.maximum(xn @ w1n.T + b1n, 0.0)
    zn = hn @ w2n.T + b2n
    dist = ((zn[:, None, :] - cn[None, :, :]) ** 2).sum(-1)
    qn = 1.0 / (1.0 + dist)
    qn = qn ** 1.5
    qn = qn / qn.sum(1, keepdims=True)

    assert z.shape == (N, L) and q.shape == (N, K)
    np.testing.assert_allclose(np.asarray(z), zn, rtol=2e-2, atol=3e-2)
    np.testing.assert_allclose(np.asarray(q), qn, rtol=3e-2, atol=2e-2)
    assert bool(jnp.allclose(jnp.sum(q, axis=1), 1.0, atol=1e-3))
    print("KERNEL_OK")
</pallas_src>

<mosaic_0001>
module attributes {stable_mosaic.version = 11 : i64} {
  func.func @dec_kernel(%arg0: i32, %arg1: memref<128x64xbf16, #tpu.memory_space<vmem>>, %arg2: memref<32x64xbf16, #tpu.memory_space<vmem>>, %arg3: memref<32x1xf32, #tpu.memory_space<vmem>>, %arg4: memref<16x32xbf16, #tpu.memory_space<vmem>>, %arg5: memref<16x1xf32, #tpu.memory_space<vmem>>, %arg6: memref<10x16xbf16, #tpu.memory_space<vmem>>, %arg7: memref<10x1xf32, #tpu.memory_space<vmem>>, %arg8: memref<16x128xf32, #tpu.memory_space<vmem>>, %arg9: memref<10x128xf32, #tpu.memory_space<vmem>>) attributes {dimension_semantics = [#tpu.dimension_semantics<parallel>], iteration_bounds = array<i64: 2>, scalar_prefetch = 0 : i64, scratch_operands = 0 : i64, tpu.core_type = #tpu.core_type<tc>, window_params = [{transform_indices = @transform_0, window_bounds = array<i64: 128, 64>}, {pipeline_mode = #tpu.pipeline_mode<synchronous>, transform_indices = @transform_1, window_bounds = array<i64: 32, 64>}, {pipeline_mode = #tpu.pipeline_mode<synchronous>, transform_indices = @transform_2, window_bounds = array<i64: 32, 1>}, {pipeline_mode = #tpu.pipeline_mode<synchronous>, transform_indices = @transform_3, window_bounds = array<i64: 16, 32>}, {pipeline_mode = #tpu.pipeline_mode<synchronous>, transform_indices = @transform_4, window_bounds = array<i64: 16, 1>}, {pipeline_mode = #tpu.pipeline_mode<synchronous>, transform_indices = @transform_5, window_bounds = array<i64: 10, 16>}, {pipeline_mode = #tpu.pipeline_mode<synchronous>, transform_indices = @transform_6, window_bounds = array<i64: 10, 1>}, {transform_indices = @transform_7, window_bounds = array<i64: 16, 128>}, {transform_indices = @transform_8, window_bounds = array<i64: 10, 128>}]} {
    %c0 = arith.constant 0 : index
    %c0_0 = arith.constant 0 : index
    %0 = vector.load %arg2[%c0, %c0_0] : memref<32x64xbf16, #tpu.memory_space<vmem>>, vector<32x64xbf16>
    %c0_1 = arith.constant 0 : index
    %c0_2 = arith.constant 0 : index
    %1 = vector.load %arg1[%c0_1, %c0_2] : memref<128x64xbf16, #tpu.memory_space<vmem>>, vector<128x64xbf16>
    %cst = arith.constant dense<0.000000e+00> : vector<32x128xf32>
    %2 = tpu.matmul %0, %1, %cst {dimension_numbers = #tpu.dot_dimension_numbers<[1], [1], [0], [0], [0, 0, 1, 0], [], []>} : vector<32x64xbf16>, vector<128x64xbf16>, vector<32x128xf32> -> vector<32x128xf32>
    %c0_3 = arith.constant 0 : index
    %c0_4 = arith.constant 0 : index
    %3 = vector.load %arg3[%c0_3, %c0_4] : memref<32x1xf32, #tpu.memory_space<vmem>>, vector<32x1xf32>
    %4 = vector.broadcast %3 : vector<32x1xf32> to vector<32x128xf32>
    %5 = arith.addf %2, %4 : vector<32x128xf32>
    %cst_5 = arith.constant 0.000000e+00 : f32
    %6 = vector.broadcast %cst_5 : f32 to vector<32x128xf32>
    %7 = arith.maximumf %5, %6 : vector<32x128xf32>
    %c0_6 = arith.constant 0 : index
    %c0_7 = arith.constant 0 : index
    %8 = vector.load %arg4[%c0_6, %c0_7] : memref<16x32xbf16, #tpu.memory_space<vmem>>, vector<16x32xbf16>
    %9 = arith.truncf %7 : vector<32x128xf32> to vector<32x128xbf16>
    %cst_8 = arith.constant dense<0.000000e+00> : vector<16x128xf32>
    %10 = tpu.matmul %8, %9, %cst_8 {dimension_numbers = #tpu.dot_dimension_numbers<[1], [0], [0], [1], [0, 0, 1, 1], [], []>} : vector<16x32xbf16>, vector<32x128xbf16>, vector<16x128xf32> -> vector<16x128xf32>
    %c0_9 = arith.constant 0 : index
    %c0_10 = arith.constant 0 : index
    %11 = vector.load %arg5[%c0_9, %c0_10] : memref<16x1xf32, #tpu.memory_space<vmem>>, vector<16x1xf32>
    %12 = vector.broadcast %11 : vector<16x1xf32> to vector<16x128xf32>
    %13 = arith.addf %10, %12 : vector<16x128xf32>
    %c0_11 = arith.constant 0 : index
    %c0_12 = arith.constant 0 : index
    %14 = vector.load %arg8[%c0_11, %c0_12] : memref<16x128xf32, #tpu.memory_space<vmem>>, vector<16x128xf32>
    tpu.vector_store %arg8[%c0_11, %c0_12], %13 {strides = array<i32>} : memref<16x128xf32, #tpu.memory_space<vmem>>, vector<16x128xf32>,
    %15 = arith.mulf %13, %13 : vector<16x128xf32>
    %cst_13 = arith.constant dense<0.000000e+00> : vector<128xf32>
    %16 = vector.multi_reduction <add>, %15, %cst_13 [0] : vector<16x128xf32> to vector<128xf32>
    %17 = vector.shape_cast %16 : vector<128xf32> to vector<1x128xf32>
    %c0_14 = arith.constant 0 : index
    %c0_15 = arith.constant 0 : index
    %18 = vector.load %arg6[%c0_14, %c0_15] : memref<10x16xbf16, #tpu.memory_space<vmem>>, vector<10x16xbf16>
    %19 = arith.truncf %13 : vector<16x128xf32> to vector<16x128xbf16>
    %cst_16 = arith.constant dense<0.000000e+00> : vector<10x128xf32>
    %20 = tpu.matmul %18, %19, %cst_16 {dimension_numbers = #tpu.dot_dimension_numbers<[1], [0], [0], [1], [0, 0, 1, 1], [], []>} : vector<10x16xbf16>, vector<16x128xbf16>, vector<10x128xf32> -> vector<10x128xf32>
    %c0_17 = arith.constant 0 : index
    %c0_18 = arith.constant 0 : index
    %21 = vector.load %arg7[%c0_17, %c0_18] : memref<10x1xf32, #tpu.memory_space<vmem>>, vector<10x1xf32>
    %22 = vector.broadcast %21 : vector<10x1xf32> to vector<10x128xf32>
    %23 = vector.broadcast %17 : vector<1x128xf32> to vector<10x128xf32>
    %24 = arith.addf %22, %23 : vector<10x128xf32>
    %25 = arith.addf %24, %20 : vector<10x128xf32>
    %cst_19 = arith.constant 0.000000e+00 : f32
    %26 = vector.broadcast %cst_19 : f32 to vector<10x128xf32>
    %27 = arith.maximumf %25, %26 : vector<10x128xf32>
    %cst_20 = arith.constant 1.000000e+00 : f32
    %28 = vector.broadcast %cst_20 : f32 to vector<10x128xf32>
    %29 = arith.addf %28, %27 : vector<10x128xf32>
    %30 = tpu.reciprocal %29 {approx = true} : vector<10x128xf32> -> vector<10x128xf32>
    %31 = math.sqrt %30 : vector<10x128xf32>
    %32 = arith.mulf %30, %31 : vector<10x128xf32>
    %cst_21 = arith.constant dense<0.000000e+00> : vector<128xf32>
    %33 = vector.multi_reduction <add>, %32, %cst_21 [0] : vector<10x128xf32> to vector<128xf32>
    %34 = vector.shape_cast %33 : vector<128xf32> to vector<1x128xf32>
    %35 = tpu.reciprocal %34 : vector<1x128xf32> -> vector<1x128xf32>
    %36 = vector.broadcast %35 : vector<1x128xf32> to vector<10x128xf32>
    %37 = arith.mulf %32, %36 : vector<10x128xf32>
    %c0_22 = arith.constant 0 : index
    %c0_23 = arith.constant 0 : index
    %38 = vector.load %arg9[%c0_22, %c0_23] : memref<10x128xf32, #tpu.memory_space<vmem>>, vector<10x128xf32>
    tpu.vector_store %arg9[%c0_22, %c0_23], %37 {strides = array<i32>} : memref<10x128xf32, #tpu.memory_space<vmem>>, vector<10x128xf32>,
    return
  }
  func.func @transform_0(%arg0: i32) -> (i32, i32) {
    %c0_i32 = arith.constant 0 : i32
    %c0_i32_0 = arith.constant 0 : i32
    return %arg0, %c0_i32 : i32, i32
  }
  func.func @transform_1(%arg0: i32) -> (i32, i32) {
    %c0_i32 = arith.constant 0 : i32
    %c0_i32_0 = arith.constant 0 : i32
    %c0_i32_1 = arith.constant 0 : i32
    return %c0_i32, %c0_i32_0 : i32, i32
  }
  func.func @transform_2(%arg0: i32) -> (i32, i32) {
    %c0_i32 = arith.constant 0 : i32
    %c0_i32_0 = arith.constant 0 : i32
    %c0_i32_1 = arith.constant 0 : i32
    return %c0_i32, %c0_i32_0 : i32, i32
  }
  func.func @transform_3(%arg0: i32) -> (i32, i32) {
    %c0_i32 = arith.constant 0 : i32
    %c0_i32_0 = arith.constant 0 : i32
    %c0_i32_1 = arith.constant 0 : i32
    return %c0_i32, %c0_i32_0 : i32, i32
  }
  func.func @transform_4(%arg0: i32) -> (i32, i32) {
    %c0_i32 = arith.constant 0 : i32
    %c0_i32_0 = arith.constant 0 : i32
    %c0_i32_1 = arith.constant 0 : i32
    return %c0_i32, %c0_i32_0 : i32, i32
  }
  func.func @transform_5(%arg0: i32) -> (i32, i32) {
    %c0_i32 = arith.constant 0 : i32
    %c0_i32_0 = arith.constant 0 : i32
    %c0_i32_1 = arith.constant 0 : i32
    return %c0_i32, %c0_i32_0 : i32, i32
  }
  func.func @transform_6(%arg0: i32) -> (i32, i32) {
    %c0_i32 = arith.constant 0 : i32
    %c0_i32_0 = arith.constant 0 : i32
    %c0_i32_1 = arith.constant 0 : i32
    return %c0_i32, %c0_i32_0 : i32, i32
  }
  func.func @transform_7(%arg0: i32) -> (i32, i32) {
    %c0_i32 = arith.constant 0 : i32
    %c0_i32_0 = arith.constant 0 : i32
    return %c0_i32, %arg0 : i32, i32
  }
  func.func @transform_8(%arg0: i32) -> (i32, i32) {
    %c0_i32 = arith.constant 0 : i32
    %c0_i32_0 = arith.constant 0 : i32
    return %c0_i32, %arg0 : i32, i32
  }
}

module attributes {stable_mosaic.version = 11 : i64} {
  func.func @dec_kernel(%arg0: i32, %arg1: memref<128x64xbf16, #tpu.memory_space<vmem>>, %arg2: memref<32x64xbf16, #tpu.memory_space<vmem>>, %arg3: memref<32x1xf32, #tpu.memory_space<vmem>>, %arg4: memref<16x32xbf16, #tpu.memory_space<vmem>>, %arg5: memref<16x1xf32, #tpu.memory_space<vmem>>, %arg6: memref<10x16xbf16, #tpu.memory_space<vmem>>, %arg7: memref<10x1xf32, #tpu.memory_space<vmem>>, %arg8: memref<16x128xf32, #tpu.memory_space<vmem>>, %arg9: memref<10x128xf32, #tpu.memory_space<vmem>>) attributes {dimension_semantics = [#tpu.dimension_semantics<parallel>], iteration_bounds = array<i64: 2>, scalar_prefetch = 0 : i64, scratch_operands = 0 : i64, tpu.core_type = #tpu.core_type<tc>, window_params = [{transform_indices = @transform_0, window_bounds = array<i64: 128, 64>}, {pipeline_mode = #tpu.pipeline_mode<synchronous>, transform_indices = @transform_1, window_bounds = array<i64: 32, 64>}, {pipeline_mode = #tpu.pipeline_mode<synchronous>, transform_indices = @transform_2, window_bounds = array<i64: 32, 1>}, {pipeline_mode = #tpu.pipeline_mode<synchronous>, transform_indices = @transform_3, window_bounds = array<i64: 16, 32>}, {pipeline_mode = #tpu.pipeline_mode<synchronous>, transform_indices = @transform_4, window_bounds = array<i64: 16, 1>}, {pipeline_mode = #tpu.pipeline_mode<synchronous>, transform_indices = @transform_5, window_bounds = array<i64: 10, 16>}, {pipeline_mode = #tpu.pipeline_mode<synchronous>, transform_indices = @transform_6, window_bounds = array<i64: 10, 1>}, {transform_indices = @transform_7, window_bounds = array<i64: 16, 128>}, {transform_indices = @transform_8, window_bounds = array<i64: 10, 128>}]} {
    %c0 = arith.constant 0 : index
    %c0_0 = arith.constant 0 : index
    %0 = vector.load %arg2[%c0, %c0_0] : memref<32x64xbf16, #tpu.memory_space<vmem>>, vector<32x64xbf16>
    %c0_1 = arith.constant 0 : index
    %c0_2 = arith.constant 0 : index
    %1 = vector.load %arg1[%c0_1, %c0_2] : memref<128x64xbf16, #tpu.memory_space<vmem>>, vector<128x64xbf16>
    %cst = arith.constant dense<0.000000e+00> : vector<32x128xf32>
    %2 = tpu.matmul %0, %1, %cst {dimension_numbers = #tpu.dot_dimension_numbers<[1], [1], [0], [0], [0, 0, 1, 0], [], []>} : vector<32x64xbf16>, vector<128x64xbf16>, vector<32x128xf32> -> vector<32x128xf32>
    %c0_3 = arith.constant 0 : index
    %c0_4 = arith.constant 0 : index
    %3 = vector.load %arg3[%c0_3, %c0_4] : memref<32x1xf32, #tpu.memory_space<vmem>>, vector<32x1xf32>
    %4 = vector.broadcast %3 : vector<32x1xf32> to vector<32x128xf32>
    %5 = arith.addf %2, %4 : vector<32x128xf32>
    %cst_5 = arith.constant 0.000000e+00 : f32
    %6 = vector.broadcast %cst_5 : f32 to vector<32x128xf32>
    %7 = arith.maximumf %5, %6 : vector<32x128xf32>
    %c0_6 = arith.constant 0 : index
    %c0_7 = arith.constant 0 : index
    %8 = vector.load %arg4[%c0_6, %c0_7] : memref<16x32xbf16, #tpu.memory_space<vmem>>, vector<16x32xbf16>
    %9 = arith.truncf %7 : vector<32x128xf32> to vector<32x128xbf16>
    %cst_8 = arith.constant dense<0.000000e+00> : vector<16x128xf32>
    %10 = tpu.matmul %8, %9, %cst_8 {dimension_numbers = #tpu.dot_dimension_numbers<[1], [0], [0], [1], [0, 0, 1, 1], [], []>} : vector<16x32xbf16>, vector<32x128xbf16>, vector<16x128xf32> -> vector<16x128xf32>
    %c0_9 = arith.constant 0 : index
    %c0_10 = arith.constant 0 : index
    %11 = vector.load %arg5[%c0_9, %c0_10] : memref<16x1xf32, #tpu.memory_space<vmem>>, vector<16x1xf32>
    %12 = vector.broadcast %11 : vector<16x1xf32> to vector<16x128xf32>
    %13 = arith.addf %10, %12 : vector<16x128xf32>
    %c0_11 = arith.constant 0 : index
    %c0_12 = arith.constant 0 : index
    %14 = vector.load %arg8[%c0_11, %c0_12] : memref<16x128xf32, #tpu.memory_space<vmem>>, vector<16x128xf32>
    tpu.vector_store %arg8[%c0_11, %c0_12], %13 {strides = array<i32>} : memref<16x128xf32, #tpu.memory_space<vmem>>, vector<16x128xf32>,
    %15 = arith.mulf %13, %13 : vector<16x128xf32>
    %cst_13 = arith.constant dense<0.000000e+00> : vector<128xf32>
    %16 = vector.multi_reduction <add>, %15, %cst_13 [0] : vector<16x128xf32> to vector<128xf32>
    %17 = vector.shape_cast %16 : vector<128xf32> to vector<1x128xf32>
    %c0_14 = arith.constant 0 : index
    %c0_15 = arith.constant 0 : index
    %18 = vector.load %arg6[%c0_14, %c0_15] : memref<10x16xbf16, #tpu.memory_space<vmem>>, vector<10x16xbf16>
    %19 = arith.truncf %13 : vector<16x128xf32> to vector<16x128xbf16>
    %cst_16 = arith.constant dense<0.000000e+00> : vector<10x128xf32>
    %20 = tpu.matmul %18, %19, %cst_16 {dimension_numbers = #tpu.dot_dimension_numbers<[1], [0], [0], [1], [0, 0, 1, 1], [], []>} : vector<10x16xbf16>, vector<16x128xbf16>, vector<10x128xf32> -> vector<10x128xf32>
    %c0_17 = arith.constant 0 : index
    %c0_18 = arith.constant 0 : index
    %21 = vector.load %arg7[%c0_17, %c0_18] : memref<10x1xf32, #tpu.memory_space<vmem>>, vector<10x1xf32>
    %22 = vector.broadcast %21 : vector<10x1xf32> to vector<10x128xf32>
    %23 = vector.broadcast %17 : vector<1x128xf32> to vector<10x128xf32>
    %24 = arith.addf %22, %23 : vector<10x128xf32>
    %25 = arith.addf %24, %20 : vector<10x128xf32>
    %cst_19 = arith.constant 0.000000e+00 : f32
    %26 = vector.broadcast %cst_19 : f32 to vector<10x128xf32>
    %27 = arith.maximumf %25, %26 : vector<10x128xf32>
    %cst_20 = arith.constant 1.000000e+00 : f32
    %28 = vector.broadcast %cst_20 : f32 to vector<10x128xf32>
    %29 = arith.addf %28, %27 : vector<10x128xf32>
    %30 = tpu.reciprocal %29 {approx = true} : vector<10x128xf32> -> vector<10x128xf32>
    %31 = math.sqrt %30 : vector<10x128xf32>
    %32 = arith.mulf %30, %31 : vector<10x128xf32>
    %cst_21 = arith.constant dense<0.000000e+00> : vector<128xf32>
    %33 = vector.multi_reduction <add>, %32, %cst_21 [0] : vector<10x128xf32> to vector<128xf32>
    %34 = vector.shape_cast %33 : vector<128xf32> to vector<1x128xf32>
    %35 = tpu.reciprocal %34 : vector<1x128xf32> -> vector<1x128xf32>
    %36 = vector.broadcast %35 : vector<1x128xf32> to vector<10x128xf32>
    %37 = arith.mulf %32, %36 : vector<10x128xf32>
    %c0_22 = arith.constant 0 : index
    %c0_23 = arith.constant 0 : index
    %38 = vector.load %arg9[%c0_22, %c0_23] : memref<10x128xf32, #tpu.memory_space<vmem>>, vector<10x128xf32>
    tpu.vector_store %arg9[%c0_22, %c0_23], %37 {strides = array<i32>} : memref<10x128xf32, #tpu.memory_space<vmem>>, vector<10x128xf32>,
    return
  }
  func.func @transform_0(%arg0: i32) -> (i32, i32) {
    %c0_i32 = arith.constant 0 : i32
    %c0_i32_0 = arith.constant 0 : i32
    return %arg0, %c0_i32 : i32, i32
  }
  func.func @transform_1(%arg0: i32) -> (i32, i32) {
    %c0_i32 = arith.constant 0 : i32
    %c0_i32_0 = arith.constant 0 : i32
    %c0_i32_1 = arith.constant 0 : i32
    return %c0_i32, %c0_i32_0 : i32, i32
  }
  func.func @transform_2(%arg0: i32) -> (i32, i32) {
    %c0_i32 = arith.constant 0 : i32
    %c0_i32_0 = arith.constant 0 : i32
    %c0_i32_1 = arith.constant 0 : i32
    return %c0_i32, %c0_i32_0 : i32, i32
  }
  func.func @transform_3(%arg0: i32) -> (i32, i32) {
    %c0_i32 = arith.constant 0 : i32
    %c0_i32_0 = arith.constant 0 : i32
    %c0_i32_1 = arith.constant 0 : i32
    return %c0_i32, %c0_i32_0 : i32, i32
  }
  func.func @transform_4(%arg0: i32) -> (i32, i32) {
    %c0_i32 = arith.constant 0 : i32
    %c0_i32_0 = arith.constant 0 : i32
    %c0_i32_1 = arith.constant 0 : i32
    return %c0_i32, %c0_i32_0 : i32, i32
  }
  func.func @transform_5(%arg0: i32) -> (i32, i32) {
    %c0_i32 = arith.constant 0 : i32
    %c0_i32_0 = arith.constant 0 : i32
    %c0_i32_1 = arith.constant 0 : i32
    return %c0_i32, %c0_i32_0 : i32, i32
  }
  func.func @transform_6(%arg0: i32) -> (i32, i32) {
    %c0_i32 = arith.constant 0 : i32
    %c0_i32_0 = arith.constant 0 : i32
    %c0_i32_1 = arith.constant 0 : i32
    return %c0_i32, %c0_i32_0 : i32, i32
  }
  func.func @transform_7(%arg0: i32) -> (i32, i32) {
    %c0_i32 = arith.constant 0 : i32
    %c0_i32_0 = arith.constant 0 : i32
    return %c0_i32, %arg0 : i32, i32
  }
  func.func @transform_8(%arg0: i32) -> (i32, i32) {
    %c0_i32 = arith.constant 0 : i32
    %c0_i32_0 = arith.constant 0 : i32
    return %c0_i32, %arg0 : i32, i32
  }
}

</mosaic_0001>

<llo_original>
// kernel: tpu_custom_call.1
$region0: #{tpu_custom_call.1}
  #allocation0 [shape = 'u32[]', space=smem, size = 0x4, offset = 0x4, fixed_abs, tag = 'smem constant byte address 0x4 - core index']
  #allocation1 [shape = 'u32[144,128]{1,0:T(1,128)}', space=vmem, size = 0x12000, scoped, tag = 'internal scratch']
  %s0 = inlined_call_operand.vmem [shape: bf16[256,64], index: 0, kind: input, shape index: {}]
  %s1 = inlined_call_operand.vmem [shape: bf16[32,64], index: 1, kind: input, shape index: {}]
  %s2 = inlined_call_operand.vmem [shape: f32[32,1], index: 2, kind: input, shape index: {}]
  %s3 = inlined_call_operand.vmem [shape: bf16[16,32], index: 3, kind: input, shape index: {}]
  %s4 = inlined_call_operand.vmem [shape: f32[16,1], index: 4, kind: input, shape index: {}]
  %s5 = inlined_call_operand.vmem [shape: bf16[10,16], index: 5, kind: input, shape index: {}]
  %s6 = inlined_call_operand.vmem [shape: f32[10,1], index: 6, kind: input, shape index: {}]
  %s7 = inlined_call_operand.hbm [shape: f32[16,256], index: 7, kind: output, shape index: {0}]
  %s8 = inlined_call_operand.hbm [shape: f32[10,256], index: 8, kind: output, shape index: {1}]
  %9 = xla_tuple %s7, %s8
  %s10 = sld [smem:[#allocation0]]
  $region69: #{tpu_custom_call.1} parent=0
    _
  %s12 = ssub.s32 1, %s10
  %s13 = scalar_select 0, %s12, %s10
  $region1: #{tpu_custom_call.1} parent=0
    #allocation2 [shape = 'u8[16384]{0}', space=vmem, size = 0x4000, scoped, tag = 'output window, operand 0']
    #allocation3 [shape = 's32[2]{0}', space=sflag, size = 0x8, scoped, tag = 'scoped memory for tpu_custom_call.1']
    #allocation4 [shape = 'u8[16384]{0}', space=vmem, size = 0x4000, scoped, tag = 'output window, operand 1']
    #allocation5 [shape = 's32[2]{0}', space=sflag, size = 0x8, scoped, tag = 'scoped memory for tpu_custom_call.1']
    %14 = vsyncpa [#allocation3], 0
    %s15 = scalar_lea.sflag [#allocation3], 1
    %16 = vsyncpa %s15, 0
    %17 = vsyncpa [#allocation5], 0
    %s18 = scalar_lea.sflag [#allocation5], 1
    %19 = vsyncpa %s18, 0
    loop: start=0, step=1, limit=4
    $region2: #{tpu_custom_call.1} parent=1 // loop_pre_header
      _
    $region3: #{tpu_custom_call.1} parent=1 // loop_header
      %s21 = sphi 0, %s25
      %p22 = scmp.ge.s32.totalorder %s21, 4
      %s31 = sphi 0, %s33
      %s34 = sphi 0, %s31
      %s35 = sphi 0, %s34
      %s51 = sphi 0, %s35
      %s55 = sphi 0, %s55
      %s57 = sphi 0, %s55
      %s58 = sphi 0, %s57
      %s72 = sphi 0, %s58
      %s76 = sphi 0, %s76
      %s78 = sphi 0, %s76
      %s79 = sphi 0, %s78
      %s93 = sphi 0, %s79
      %s97 = sphi 0, %s97
      %s99 = sphi 0, %s97
      %s100 = sphi 0, %s99
      %s114 = sphi 0, %s100
      %s118 = sphi 0, %s118
      %s120 = sphi 0, %s118
      %s121 = sphi 0, %s120
      %s135 = sphi 0, %s121
      %s139 = sphi 0, %s139
      %s141 = sphi 0, %s139
      %s142 = sphi 0, %s141
      %s156 = sphi 0, %s142
      %s160 = sphi 0, %s160
      %s162 = sphi 0, %s160
      %s163 = sphi 0, %s162
      %s177 = sphi 0, %s163
      %s183 = sphi 0, %s185
      %s186 = sphi 0, %s183
      %s187 = sphi 0, %s186
      %s203 = sphi 0, %s187
      %s209 = sphi 0, %s211
      %s212 = sphi 0, %s209
      %s213 = sphi 0, %s212
      %s229 = sphi 0, %s213
    $region4: #{tpu_custom_call.1} parent=1 // loop_header_branch
      %24 = sbr.rel (%p22) target = $region8
    $region5: #{tpu_custom_call.1} parent=1 // loop_body
      %s26 = ssub.s32 %s21, 1
      %s27 = ssub.s32 %s21, 2
      %s28 = sadd.s32 %s21, 1
      %s29 = ssub.s32 %s21, %s28
      %p30 = scmp.eq.s32.totalorder %s29, 0
      %s32 = sadd.s32 %s31, 1
      %s33 = scalar_select %p30, %s31, %s32
      %p36 = pneg %p30
      %p37 = scmp.eq.s32.totalorder %s21, 1
      %p38 = por %p36, %p37
      %p39 = scmp.ne.s32.totalorder %s31, %s34
      %p40 = scmp.eq.s32.totalorder %s21, 0
      %p41 = por %p39, %p40
      %p42 = scmp.ne.s32.totalorder %s31, %s34
      %p43 = scmp.eq.s32.totalorder %s26, 1
      %p44 = por %p42, %p43
      %p45 = scmp.ne.s32.totalorder %s34, %s35
      %p46 = scmp.eq.s32.totalorder %s26, 0
      %p47 = por %p45, %p46
      %p48 = scmp.ne.s32.totalorder %s34, %s35
      %p49 = scmp.eq.s32.totalorder %s27, 1
      %p50 = por %p48, %p49
      %p52 = scmp.ne.s32.totalorder %s35, %s51
      %p53 = scmp.eq.s32.totalorder %s27, 0
      %p54 = por %p52, %p53
      %s56 = sadd.s32 %s55, 1
      %p59 = scmp.eq.s32.totalorder %s21, 1
      %p60 = scmp.ne.s32.totalorder %s55, %s57
      %p61 = scmp.eq.s32.totalorder %s21, 0
      %p62 = por %p60, %p61
      %p63 = scmp.ne.s32.totalorder %s55, %s57
      %p64 = scmp.eq.s32.totalorder %s26, 1
      %p65 = por %p63, %p64
      %p66 = scmp.ne.s32.totalorder %s57, %s58
      %p67 = scmp.eq.s32.totalorder %s26, 0
      %p68 = por %p66, %p67
      %p69 = scmp.ne.s32.totalorder %s57, %s58
      %p70 = scmp.eq.s32.totalorder %s27, 1
      %p71 = por %p69, %p70
      %p73 = scmp.ne.s32.totalorder %s58, %s72
      %p74 = scmp.eq.s32.totalorder %s27, 0
      %p75 = por %p73, %p74
      %s77 = sadd.s32 %s76, 1
      %p80 = scmp.eq.s32.totalorder %s21, 1
      %p81 = scmp.ne.s32.totalorder %s76, %s78
      %p82 = scmp.eq.s32.totalorder %s21, 0
      %p83 = por %p81, %p82
      %p84 = scmp.ne.s32.totalorder %s76, %s78
      %p85 = scmp.eq.s32.totalorder %s26, 1
      %p86 = por %p84, %p85
      %p87 = scmp.ne.s32.totalorder %s78, %s79
      %p88 = scmp.eq.s32.totalorder %s26, 0
      %p89 = por %p87, %p88
      %p90 = scmp.ne.s32.totalorder %s78, %s79
      %p91 = scmp.eq.s32.totalorder %s27, 1
      %p92 = por %p90, %p91
      %p94 = scmp.ne.s32.totalorder %s79, %s93
      %p95 = scmp.eq.s32.totalorder %s27, 0
      %p96 = por %p94, %p95
      %s98 = sadd.s32 %s97, 1
      %p101 = scmp.eq.s32.totalorder %s21, 1
      %p102 = scmp.ne.s32.totalorder %s97, %s99
      %p103 = scmp.eq.s32.totalorder %s21, 0
      %p104 = por %p102, %p103
      %p105 = scmp.ne.s32.totalorder %s97, %s99
      %p106 = scmp.eq.s32.totalorder %s26, 1
      %p107 = por %p105, %p106
      %p108 = scmp.ne.s32.totalorder %s99, %s100
      %p109 = scmp.eq.s32.totalorder %s26, 0
      %p110 = por %p108, %p109
      %p111 = scmp.ne.s32.totalorder %s99, %s100
      %p112 = scmp.eq.s32.totalorder %s27, 1
      %p113 = por %p111, %p112
      %p115 = scmp.ne.s32.totalorder %s100, %s114
      %p116 = scmp.eq.s32.totalorder %s27, 0
      %p117 = por %p115, %p116
      %s119 = sadd.s32 %s118, 1
      %p122 = scmp.eq.s32.totalorder %s21, 1
      %p123 = scmp.ne.s32.totalorder %s118, %s120
      %p124 = scmp.eq.s32.totalorder %s21, 0
      %p125 = por %p123, %p124
      %p126 = scmp.ne.s32.totalorder %s118, %s120
      %p127 = scmp.eq.s32.totalorder %s26, 1
      %p128 = por %p126, %p127
      %p129 = scmp.ne.s32.totalorder %s120, %s121
      %p130 = scmp.eq.s32.totalorder %s26, 0
      %p131 = por %p129, %p130
      %p132 = scmp.ne.s32.totalorder %s120, %s121
      %p133 = scmp.eq.s32.totalorder %s27, 1
      %p134 = por %p132, %p133
      %p136 = scmp.ne.s32.totalorder %s121, %s135
      %p137 = scmp.eq.s32.totalorder %s27, 0
      %p138 = por %p136, %p137
      %s140 = sadd.s32 %s139, 1
      %p143 = scmp.eq.s32.totalorder %s21, 1
      %p144 = scmp.ne.s32.totalorder %s139, %s141
      %p145 = scmp.eq.s32.totalorder %s21, 0
      %p146 = por %p144, %p145
      %p147 = scmp.ne.s32.totalorder %s139, %s141
      %p148 = scmp.eq.s32.totalorder %s26, 1
      %p149 = por %p147, %p148
      %p150 = scmp.ne.s32.totalorder %s141, %s142
      %p151 = scmp.eq.s32.totalorder %s26, 0
      %p152 = por %p150, %p151
      %p153 = scmp.ne.s32.totalorder %s141, %s142
      %p154 = scmp.eq.s32.totalorder %s27, 1
      %p155 = por %p153, %p154
      %p157 = scmp.ne.s32.totalorder %s142, %s156
      %p158 = scmp.eq.s32.totalorder %s27, 0
      %p159 = por %p157, %p158
      %s161 = sadd.s32 %s160, 1
      %p164 = scmp.eq.s32.totalorder %s21, 1
      %p165 = scmp.ne.s32.totalorder %s160, %s162
      %p166 = scmp.eq.s32.totalorder %s21, 0
      %p167 = por %p165, %p166
      %p168 = scmp.ne.s32.totalorder %s160, %s162
      %p169 = scmp.eq.s32.totalorder %s26, 1
      %p170 = por %p168, %p169
      %p171 = scmp.ne.s32.totalorder %s162, %s163
      %p172 = scmp.eq.s32.totalorder %s26, 0
      %p173 = por %p171, %p172
      %p174 = scmp.ne.s32.totalorder %s162, %s163
      %p175 = scmp.eq.s32.totalorder %s27, 1
      %p176 = por %p174, %p175
      %p178 = scmp.ne.s32.totalorder %s163, %s177
      %p179 = scmp.eq.s32.totalorder %s27, 0
      %p180 = por %p178, %p179
      %s181 = ssub.s32 %s21, %s28
      %p182 = scmp.eq.s32.totalorder %s181, 0
      %s184 = sadd.s32 %s183, 1
      %s185 = scalar_select %p182, %s183, %s184
      %p188 = pneg %p182
      %p189 = scmp.eq.s32.totalorder %s21, 1
      %p190 = por %p188, %p189
      %p191 = scmp.ne.s32.totalorder %s183, %s186
      %p192 = scmp.eq.s32.totalorder %s21, 0
      %p193 = por %p191, %p192
      %p194 = scmp.ne.s32.totalorder %s183, %s186
      %p195 = scmp.eq.s32.totalorder %s26, 1
      %p196 = por %p194, %p195
      %p197 = scmp.ne.s32.totalorder %s186, %s187
      %p198 = scmp.eq.s32.totalorder %s26, 0
      %p199 = por %p197, %p198
      %p200 = scmp.ne.s32.totalorder %s186, %s187
      %p201 = scmp.eq.s32.totalorder %s27, 1
      %p202 = por %p200, %p201
      %p204 = scmp.ne.s32.totalorder %s187, %s203
      %p205 = scmp.eq.s32.totalorder %s27, 0
      %p206 = por %p204, %p205
      %s207 = ssub.s32 %s21, %s28
      %p208 = scmp.eq.s32.totalorder %s207, 0
      %s210 = sadd.s32 %s209, 1
      %s211 = scalar_select %p208, %s209, %s210
      %p214 = pneg %p208
      %p215 = scmp.eq.s32.totalorder %s21, 1
      %p216 = por %p214, %p215
      %p217 = scmp.ne.s32.totalorder %s209, %s212
      %p218 = scmp.eq.s32.totalorder %s21, 0
      %p219 = por %p217, %p218
      %p220 = scmp.ne.s32.totalorder %s209, %s212
      %p221 = scmp.eq.s32.totalorder %s26, 1
      %p222 = por %p220, %p221
      %p223 = scmp.ne.s32.totalorder %s212, %s213
      %p224 = scmp.eq.s32.totalorder %s26, 0
      %p225 = por %p223, %p224
      %p226 = scmp.ne.s32.totalorder %s212, %s213
      %p227 = scmp.eq.s32.totalorder %s27, 1
      %p228 = por %p226, %p227
      %p230 = scmp.ne.s32.totalorder %s213, %s229
      %p231 = scmp.eq.s32.totalorder %s27, 0
      %p232 = por %p230, %p231
      %p233 = scmp.le.s32.totalorder 1, %s21
      %p234 = scmp.lt.s32.totalorder %s21, 3
      %p235 = pnand %p233, %p234
      %p236 = pneg %p235
      // Predicated region
      $region9: #{tpu_custom_call.1} parent=5 // pred_check
        _
      $region10: #{tpu_custom_call.1} parent=5 // pred_check_branch
        %238 = sbr.rel (%p235) target = $region12
      $region11: #{tpu_custom_call.1} parent=5 // pred_region
        %s239 = ssub.s32 %s21, 1
        // Predicated region
        $region13: #{tpu_custom_call.1} parent=11 // pred_check
          %p240 = pneg %p68
        $region14: #{tpu_custom_call.1} parent=11 // pred_check_branch
          %242 = sbr.rel (%p240) target = $region16
        $region15: #{tpu_custom_call.1} parent=11 // pred_region
          _
        $region16: #{tpu_custom_call.1} parent=11 // pred_fallthru
          _
        // Predicated region
        $region17: #{tpu_custom_call.1} parent=11 // pred_check
          %p243 = pneg %p89
        $region18: #{tpu_custom_call.1} parent=11 // pred_check_branch
          %245 = sbr.rel (%p243) target = $region20
        $region19: #{tpu_custom_call.1} parent=11 // pred_region
          _
        $region20: #{tpu_custom_call.1} parent=11 // pred_fallthru
          _
        // Predicated region
        $region21: #{tpu_custom_call.1} parent=11 // pred_check
          %p246 = pneg %p110
        $region22: #{tpu_custom_call.1} parent=11 // pred_check_branch
          %248 = sbr.rel (%p246) target = $region24
        $region23: #{tpu_custom_call.1} parent=11 // pred_region
          _
        $region24: #{tpu_custom_call.1} parent=11 // pred_fallthru
          _
        // Predicated region
        $region25: #{tpu_custom_call.1} parent=11 // pred_check
          %p249 = pneg %p131
        $region26: #{tpu_custom_call.1} parent=11 // pred_check_branch
          %251 = sbr.rel (%p249) target = $region28
        $region27: #{tpu_custom_call.1} parent=11 // pred_region
          _
        $region28: #{tpu_custom_call.1} parent=11 // pred_fallthru
          _
        // Predicated region
        $region29: #{tpu_custom_call.1} parent=11 // pred_check
          %p252 = pneg %p152
        $region30: #{tpu_custom_call.1} parent=11 // pred_check_branch
          %254 = sbr.rel (%p252) target = $region32
        $region31: #{tpu_custom_call.1} parent=11 // pred_region
          _
        $region32: #{tpu_custom_call.1} parent=11 // pred_fallthru
          _
        // Predicated region
        $region33: #{tpu_custom_call.1} parent=11 // pred_check
          %p255 = pneg %p173
        $region34: #{tpu_custom_call.1} parent=11 // pred_check_branch
          %257 = sbr.rel (%p255) target = $region36
        $region35: #{tpu_custom_call.1} parent=11 // pred_region
          _
        $region36: #{tpu_custom_call.1} parent=11 // pred_fallthru
          _
      $region12: #{tpu_custom_call.1} parent=5 // pred_fallthru
        _
      %p258 = scmp.lt.s32.totalorder %s21, 2
      // Predicated region
      $region37: #{tpu_custom_call.1} parent=5 // pred_check
        %p259 = pneg %p258
      $region38: #{tpu_custom_call.1} parent=5 // pred_check_branch
        %261 = sbr.rel (%p259) target = $region40
      $region39: #{tpu_custom_call.1} parent=5 // pred_region
        // Predicated region
        $region41: #{tpu_custom_call.1} parent=39 // pred_check
          %p262 = pneg %p41
        $region42: #{tpu_custom_call.1} parent=39 // pred_check_branch
          %264 = sbr.rel (%p262) target = $region44
        $region43: #{tpu_custom_call.1} parent=39 // pred_region
          %s265 = smul.u32 16, %s21
          %p266 = scmp.lt.s32.totalorder %s265, 31
          %s267 = scalar_select %p266, %s265, 31
          %s268 = smul.addr %s267, 4
          %s269 = scalar_lea.vmem %s0, %s268
          %s270 = smul.u32 16, %s21
        $region44: #{tpu_custom_call.1} parent=39 // pred_fallthru
          _
      $region40: #{tpu_custom_call.1} parent=5 // pred_fallthru
        _
      %p271 = scmp.le.s32.totalorder 1, %s21
      %p272 = scmp.lt.s32.totalorder %s21, 3
      %p273 = pnand %p271, %p272
      %p274 = pneg %p273
      // Predicated region
      $region45: #{tpu_custom_call.1} parent=5 // pred_check
        _
      $region46: #{tpu_custom_call.1} parent=5 // pred_check_branch
        %276 = sbr.rel (%p273) target = $region48
      $region47: #{tpu_custom_call.1} parent=5 // pred_region
        %s277 = ssub.s32 %s21, 1
        %s278 = smul.u32 16, %s26
        %p279 = scmp.lt.s32.totalorder %s278, 31
        %s280 = scalar_select %p279, %s278, 31
        %s281 = smul.addr %s280, 4
        %s282 = scalar_lea.vmem %s0, %s281
        %p283 = pneg %p47
        %p284 = pneg %p44
        %p285 = pneg %p68
        %p286 = pneg %p65
        %p287 = pneg %p89
        %p288 = pneg %p86
        %p289 = pneg %p110
        %p290 = pneg %p107
        %p291 = pneg %p131
        %p292 = pneg %p128
        %p293 = pneg %p152
        %p294 = pneg %p149
        %p295 = pneg %p173
        %p296 = pneg %p170
        %p297 = pneg %p199
        %p298 = pneg %p196
        %s299 = sand.u32 %s186, 1
        %s300 = scalar_lea.sflag [#allocation3], %s299
        %s301 = sand.u32 %s186, 1
        %s302 = smul.addr %s301, 16
        %s303 = scalar_lea.vmem [#allocation2], %s302
        %p304 = pneg %p225
        %p305 = pneg %p222
        %s306 = sand.u32 %s212, 1
        %s307 = scalar_lea.sflag [#allocation5], %s306
        %s308 = sand.u32 %s212, 1
        %s309 = smul.addr %s308, 16
        %s310 = scalar_lea.vmem [#allocation4], %s309
        %s311 = smul.u32 16, %s26
        %p312 = scmp.lt.s32.totalorder %s311, 31
        %s313 = scalar_select %p312, %s311, 31
        %s314 = smul.addr %s313, 4
        %s315 = scalar_lea.vmem %s0, %s314
        %s316 = smul.u32 16, %s26
        %v318 = vld [vmem:[%s1] sm:$0xf]
        %v319 = vld [vmem:[%s1 + $0x4] sm:$0xf]
        %v320 = vld [vmem:[%s1 + $0x8] sm:$0xf]
        %v321 = vld [vmem:[%s1 + $0xc] sm:$0xf]
        %v322 = vld [vmem:[%s315] sm:$0xf]
        %v323 = vld [vmem:[%s315 + $0x4] sm:$0xf]
        %v324 = vld [vmem:[%s315 + $0x8] sm:$0xf]
        %v325 = vld [vmem:[%s315 + $0xc] sm:$0xf]
        %v326 = vld [vmem:[%s315 + $0x10] sm:$0xf]
        %v327 = vld [vmem:[%s315 + $0x14] sm:$0xf]
        %v328 = vld [vmem:[%s315 + $0x18] sm:$0xf]
        %v329 = vld [vmem:[%s315 + $0x1c] sm:$0xf]
        %v330 = vld [vmem:[%s315 + $0x20] sm:$0xf]
        %v331 = vld [vmem:[%s315 + $0x24] sm:$0xf]
        %v332 = vld [vmem:[%s315 + $0x28] sm:$0xf]
        %v333 = vld [vmem:[%s315 + $0x2c] sm:$0xf]
        %v334 = vld [vmem:[%s315 + $0x30] sm:$0xf]
        %v335 = vld [vmem:[%s315 + $0x34] sm:$0xf]
        %v336 = vld [vmem:[%s315 + $0x38] sm:$0xf]
        %v337 = vld [vmem:[%s315 + $0x3c] sm:$0xf]
        %v338 = vld [vmem:[%s2] sm:$0xff]
        %v339 = vld [vmem:[%s2 + $0x8] sm:$0xff]
        %v340 = vld [vmem:[%s2 + $0x10] sm:$0xff]
        %v341 = vld [vmem:[%s2 + $0x18] sm:$0xff]
        %343 = vset.pattern.permute.xlu0 0
        %344 = vperm.xlu0 %343, %v338
        %v345 = vpop.permute.xlu0 %344
        %348 = vset.pattern.permute.xlu0 0
        %349 = vperm.xlu0 %348, %v339
        %v350 = vpop.permute.xlu0 %349
        %353 = vset.pattern.permute.xlu0 0
        %354 = vperm.xlu0 %353, %v340
        %v355 = vpop.permute.xlu0 %354
        %358 = vset.pattern.permute.xlu0 0
        %359 = vperm.xlu0 %358, %v341
        %v360 = vpop.permute.xlu0 %359
        %v366 = vunpack.c.l.b16 %v318
        %v367 = vunpack.c.l.b16 %v319
        %v368 = vunpack.c.l.b16 %v320
        %v369 = vunpack.c.l.b16 %v321
        %v370 = vpack.c.b16 %v367, %v366
        %v371 = vpack.c.b16 %v369, %v368
        %v388 = vunpack.c.l.b16 %v322
        %v389 = vunpack.c.l.b16 %v323
        %v390 = vunpack.c.l.b16 %v324
        %v391 = vunpack.c.l.b16 %v325
        %v392 = vunpack.c.l.b16 %v326
        %v393 = vunpack.c.l.b16 %v327
        %v394 = vunpack.c.l.b16 %v328
        %v395 = vunpack.c.l.b16 %v329
        %v396 = vunpack.c.l.b16 %v330
        %v397 = vunpack.c.l.b16 %v331
        %v398 = vunpack.c.l.b16 %v332
        %v399 = vunpack.c.l.b16 %v333
        %v400 = vunpack.c.l.b16 %v334
        %v401 = vunpack.c.l.b16 %v335
        %v402 = vunpack.c.l.b16 %v336
        %v403 = vunpack.c.l.b16 %v337
        %v404 = vpack.c.b16 %v389, %v388
        %v405 = vpack.c.b16 %v391, %v390
        %v406 = vpack.c.b16 %v393, %v392
        %v407 = vpack.c.b16 %v395, %v394
        %v408 = vpack.c.b16 %v397, %v396
        %v409 = vpack.c.b16 %v399, %v398
        %v410 = vpack.c.b16 %v401, %v400
        %v411 = vpack.c.b16 %v403, %v402
        %vm412 = vcmask 523264
        %v414 = vsel %vm412, %v370, 0
        %v417 = vsel %vm412, %v371, 0
        %v420 = vsel %vm412, %v404, 0
        %v423 = vsel %vm412, %v405, 0
        %v426 = vsel %vm412, %v406, 0
        %v429 = vsel %vm412, %v407, 0
        %v432 = vsel %vm412, %v408, 0
        %v435 = vsel %vm412, %v409, 0
        %v438 = vsel %vm412, %v410, 0
        %v441 = vsel %vm412, %v411, 0
        %443 = vmatprep.subr.bf16.mxu0 0
        %444 = vmatpush1.bf16.xpose.msra.mxu0 %v420
        %445 = vmatprep.subr.bf16.mxu0 0
        %446 = vmatpush1.bf16.xpose.msra.mxu0 %v423
        %447 = vmatprep.subr.bf16.mxu0 0
        %448 = vmatpush1.bf16.xpose.msra.mxu0 %v426
        %449 = vmatprep.subr.bf16.mxu0 0
        %450 = vmatpush1.bf16.xpose.msra.mxu0 %v429
        %451 = vmatprep.subr.bf16.mxu0 0
        %452 = vmatpush1.bf16.xpose.msra.mxu0 %v432
        %453 = vmatprep.subr.bf16.mxu0 0
        %454 = vmatpush1.bf16.xpose.msra.mxu0 %v435
        %455 = vmatprep.subr.bf16.mxu0 0
        %456 = vmatpush1.bf16.xpose.msra.mxu0 %v438
        %457 = vmatprep.subr.bf16.mxu0 0
        %458 = vmatpush1.bf16.xpose.msra.mxu0 %v441
        %459 = vmatprep.subr.bf16.mxu0 0
        %460 = vmatpush1.bf16.xpose.msra.mxu0 0
        %461 = vmatprep.subr.bf16.mxu0 0
        %462 = vmatpush1.bf16.xpose.msra.mxu0 0
        %463 = vmatprep.subr.bf16.mxu0 0
        %464 = vmatpush1.bf16.xpose.msra.mxu0 0
        %465 = vmatprep.subr.bf16.mxu0 0
        %466 = vmatpush1.bf16.xpose.msra.mxu0 0
        %467 = vmatprep.subr.bf16.mxu0 0
        %468 = vmatpush1.bf16.xpose.msra.mxu0 0
        %469 = vmatprep.subr.bf16.mxu0 0
        %470 = vmatpush1.bf16.xpose.msra.mxu0 0
        %471 = vmatprep.subr.bf16.mxu0 0
        %472 = vmatpush1.bf16.xpose.msra.mxu0 0
        %473 = vmatprep.subr.bf16.mxu0 0
        %474 = vmatpush1.bf16.xpose.msra.mxu0 0
        %475 = vmatprep.mubr.bf16.mxu0 0
        %476 = vmatmul.mubr.bf16.gmra.mrb[0].mxu0 %v414
        %v477 = vpop.f32.mrb[0].mxu0
        %v478 = vadd.f32 %v345, %v477
        %v479 = vpop.f32.mrb[0].mxu0
        %v480 = vpop.f32.mrb[0].mxu0
        %v481 = vadd.f32 %v350, %v480
        %v482 = vpop.f32.mrb[0].mxu0
        %483 = vmatprep.mubr.bf16.mxu0 0
        %484 = vmatmul.mubr.bf16.gmra.mrb[0].mxu0 %v417
        %v485 = vpop.f32.mrb[0].mxu0
        %v486 = vadd.f32 %v355, %v485
        %v487 = vpop.f32.mrb[0].mxu0
        %v488 = vpop.f32.mrb[0].mxu0
        %v489 = vadd.f32 %v360, %v488
        %v490 = vpop.f32.mrb[0].mxu0
        %491 = vdwg.mxu0
        %v492 = vmax.f32 %v478, 0.0
        %v493 = vmax.f32 %v481, 0.0
        %v494 = vmax.f32 %v486, 0.0
        %v495 = vmax.f32 %v489, 0.0
        %v496 = vld [vmem:[%s3] sm:$0xf]
        %v497 = vld [vmem:[%s3 + $0x4] sm:$0xf]
        %v498 = vpack.c.bf16 %v493, %v492
        %v499 = vpack.c.bf16 %v495, %v494
        %v500 = vld [vmem:[%s4] sm:$0xff]
        %v501 = vld [vmem:[%s4 + $0x8] sm:$0xff]
        %503 = vset.pattern.permute.xlu0 0
        %504 = vperm.xlu0 %503, %v500
        %v505 = vpop.permute.xlu0 %504
        %508 = vset.pattern.permute.xlu0 0
        %509 = vperm.xlu0 %508, %v501
        %v510 = vpop.permute.xlu0 %509
        %v514 = vunpack.c.l.b16 %v496
        %v515 = vunpack.c.l.b16 %v497
        %v516 = vpack.c.b16 %v515, %v514
        %vm517 = vcmask 261120
        %v519 = vsel %vm517, %v516, 0
        %521 = vmatprep.subr.bf16.mxu0 0
        %522 = vmatpush1.bf16.msra.mxu0 %v498
        %523 = vmatprep.subr.bf16.mxu0 0
        %524 = vmatpush1.bf16.msra.mxu0 %v499
        %525 = vmatprep.subr.bf16.mxu0 0
        %526 = vmatpush1.bf16.msra.mxu0 0
        %527 = vmatprep.subr.bf16.mxu0 0
        %528 = vmatpush1.bf16.msra.mxu0 0
        %529 = vmatprep.subr.bf16.mxu0 0
        %530 = vmatpush1.bf16.msra.mxu0 0
        %531 = vmatprep.subr.bf16.mxu0 0
        %532 = vmatpush1.bf16.msra.mxu0 0
        %533 = vmatprep.subr.bf16.mxu0 0
        %534 = vmatpush1.bf16.msra.mxu0 0
        %535 = vmatprep.subr.bf16.mxu0 0
        %536 = vmatpush1.bf16.msra.mxu0 0
        %537 = vmatprep.subr.bf16.mxu0 0
        %538 = vmatpush1.bf16.msra.mxu0 0
        %539 = vmatprep.subr.bf16.mxu0 0
        %540 = vmatpush1.bf16.msra.mxu0 0
        %541 = vmatprep.subr.bf16.mxu0 0
        %542 = vmatpush1.bf16.msra.mxu0 0
        %543 = vmatprep.subr.bf16.mxu0 0
        %544 = vmatpush1.bf16.msra.mxu0 0
        %545 = vmatprep.subr.bf16.mxu0 0
        %546 = vmatpush1.bf16.msra.mxu0 0
        %547 = vmatprep.subr.bf16.mxu0 0
        %548 = vmatpush1.bf16.msra.mxu0 0
        %549 = vmatprep.subr.bf16.mxu0 0
        %550 = vmatpush1.bf16.msra.mxu0 0
        %551 = vmatprep.subr.bf16.mxu0 0
        %552 = vmatpush1.bf16.msra.mxu0 0
        %553 = vmatprep.mubr.bf16.mxu0 0
        %554 = vmatmul.mubr.bf16.gmra.mrb[0].mxu0 %v519
        %v555 = vpop.f32.mrb[0].mxu0
        %v556 = vadd.f32 %v505, %v555
        %v557 = vpop.f32.mrb[0].mxu0
        %v558 = vpop.f32.mrb[0].mxu0
        %v559 = vadd.f32 %v510, %v558
        %v560 = vpop.f32.mrb[0].mxu0
        %561 = vdwg.mxu0
        %562 = vst [vmem:[%s303] sm:$0xff] %v556
        %563 = vst [vmem:[%s303 + $0x8] sm:$0xff] %v559
        %v564 = vmul.f32 %v556, %v556
        %v565 = vmul.f32 %v559, %v559
        %v566 = vadd.f32 %v564, %v565
        %v567 = vrot.slane %v566, 4
        %v568 = vadd.f32 %v566, %v567
        %v569 = vrot.slane %v568, 2
        %v570 = vadd.f32 %v568, %v569
        %v571 = vrot.slane %v570, 1
        %v572 = vadd.f32 %v570, %v571
        %v573 = vld [vmem:[%s5] sm:$0xf]
        %v574 = vld [vmem:[%s5 + $0x4] sm:$0x1]
        %v575 = vpack.c.bf16 %v559, %v556
        %v578 = vunpack.c.l.b16 %v573
        %v579 = vunpack.c.l.b16 %v574
        %v580 = vpack.c.b16 %v579, %v578
        %vm581 = vcmask 130048
        %v583 = vsel %vm581, %v580, 0
        %585 = vmatprep.subr.bf16.mxu0 0
        %586 = vmatpush1.bf16.msra.mxu0 %v575
        %587 = vmatprep.subr.bf16.mxu0 0
        %588 = vmatpush1.bf16.msra.mxu0 0
        %589 = vmatprep.subr.bf16.mxu0 0
        %590 = vmatpush1.bf16.msra.mxu0 0
        %591 = vmatprep.subr.bf16.mxu0 0
        %592 = vmatpush1.bf16.msra.mxu0 0
        %593 = vmatprep.subr.bf16.mxu0 0
        %594 = vmatpush1.bf16.msra.mxu0 0
        %595 = vmatprep.subr.bf16.mxu0 0
        %596 = vmatpush1.bf16.msra.mxu0 0
        %597 = vmatprep.subr.bf16.mxu0 0
        %598 = vmatpush1.bf16.msra.mxu0 0
        %599 = vmatprep.subr.bf16.mxu0 0
        %600 = vmatpush1.bf16.msra.mxu0 0
        %601 = vmatprep.subr.bf16.mxu0 0
        %602 = vmatpush1.bf16.msra.mxu0 0
        %603 = vmatprep.subr.bf16.mxu0 0
        %604 = vmatpush1.bf16.msra.mxu0 0
        %605 = vmatprep.subr.bf16.mxu0 0
        %606 = vmatpush1.bf16.msra.mxu0 0
        %607 = vmatprep.subr.bf16.mxu0 0
        %608 = vmatpush1.bf16.msra.mxu0 0
        %609 = vmatprep.subr.bf16.mxu0 0
        %610 = vmatpush1.bf16.msra.mxu0 0
        %611 = vmatprep.subr.bf16.mxu0 0
        %612 = vmatpush1.bf16.msra.mxu0 0
        %613 = vmatprep.subr.bf16.mxu0 0
        %614 = vmatpush1.bf16.msra.mxu0 0
        %615 = vmatprep.subr.bf16.mxu0 0
        %616 = vmatpush1.bf16.msra.mxu0 0
        %617 = vmatprep.mubr.bf16.mxu0 0
        %618 = vmatmul.mubr.bf16.gmra.mrb[0].mxu0 %v583
        %v619 = vpop.f32.mrb[0].mxu0
        %v620 = vadd.f32 0.0, %v619
        %v621 = vpop.f32.mrb[0].mxu0
        %v622 = vpop.f32.mrb[0].mxu0
        %v623 = vadd.f32 0.0, %v622
        %v624 = vpop.f32.mrb[0].mxu0
        %625 = vdwg.mxu0
        %v626 = vld [vmem:[%s6] sm:$0xff]
        %v627 = vld [vmem:[%s6 + $0x8] sm:$0x3]
        %629 = vset.pattern.permute.xlu0 0
        %630 = vperm.xlu0 %629, %v626
        %v631 = vpop.permute.xlu0 %630
        %634 = vset.pattern.permute.xlu0 0
        %635 = vperm.xlu0 %634, %v627
        %v636 = vpop.permute.xlu0 %635
        %v638 = vadd.f32 %v631, %v572
        %v639 = vadd.f32 %v636, %v572
        %v640 = vadd.f32 %v638, %v620
        %v641 = vadd.f32 %v639, %v623
        %v642 = vmax.f32 %v640, 0.0
        %v643 = vmax.f32 %v641, 0.0
        %v644 = vadd.f32 %v642, 1.0
        %v645 = vadd.f32 %v643, 1.0
        %v646 = vrcp.pop %v644
        %v647 = vrcp.pop %v645
        %v648 = vrsqrt.pop %v646
        %v649 = vmul.f32 %v646, %v648
        %vm650 = vcmp.eq.f32.partialorder %v646, inf
        %v651 = vsel %vm650, %v646, %v649
        %vm652 = vcmp.eq.f32.partialorder %v646, 0.0
        %v653 = vand.u32 %v646, 2147483648
        %v654 = vsel %vm652, %v653, %v651
        %v655 = vrsqrt.pop %v647
        %v656 = vmul.f32 %v647, %v655
        %vm657 = vcmp.eq.f32.partialorder %v647, inf
        %v658 = vsel %vm657, %v647, %v656
        %vm659 = vcmp.eq.f32.partialorder %v647, 0.0
        %v660 = vand.u32 %v647, 2147483648
        %v661 = vsel %vm659, %v660, %v658
        %v662 = vmul.f32 %v646, %v654
        %v663 = vmul.f32 %v647, %v661
        %vm664 = vcmask 1041408
        %v665 = vsel %vm664, %v663, 0.0
        %v666 = vadd.f32 %v662, %v665
        %v667 = vrot.slane %v666, 4
        %v668 = vadd.f32 %v666, %v667
        %v669 = vrot.slane %v668, 2
        %v670 = vadd.f32 %v668, %v669
        %v671 = vrot.slane %v670, 1
        %v672 = vadd.f32 %v670, %v671
        %v673 = vrcp.pop %v672
        %v674 = vmul.f32 %v662, %v673
        %v675 = vmul.f32 %v663, %v673
        %676 = vst [vmem:[%s310] sm:$0xff] %v674
        %677 = vst [vmem:[%s310 + $0x8] sm:$0x3] %v675
        %s678 = sand.u32 %s186, 1
        %s679 = scalar_lea.sflag [#allocation3], %s678
        %s680 = sand.u32 %s186, 1
        %s681 = smul.addr %s680, 16
        %s682 = scalar_lea.vmem [#allocation2], %s681
        %s683 = sand.u32 %s212, 1
        %s684 = scalar_lea.sflag [#allocation5], %s683
        %s685 = sand.u32 %s212, 1
        %s686 = smul.addr %s685, 16
        %s687 = scalar_lea.vmem [#allocation4], %s686
        // Predicated region
        $region49: #{tpu_custom_call.1} parent=47 // pred_check
          %p688 = pneg %p196
        $region50: #{tpu_custom_call.1} parent=47 // pred_check_branch
          %690 = sbr.rel (%p688) target = $region52
        $region51: #{tpu_custom_call.1} parent=47 // pred_region
          %s692 = ssub.s32 256, 256
          %693 = vsyncadd %s679, %s692
          %s694 = smul.addr %s26, 128
          %s695 = scalar_lea.hbm %s7, %s694
          %s696 = sshll.u32 %s682, 4
          %s697 = int_to_ptr.vmem [resolvable:$true] %s696
          %702 = dma.vmem_to_hbm [thread:$0]  %s697, 256, %s695, %s679, 128, 256, 8
        $region52: #{tpu_custom_call.1} parent=47 // pred_fallthru
          _
        // Predicated region
        $region53: #{tpu_custom_call.1} parent=47 // pred_check
          %p703 = pneg %p222
        $region54: #{tpu_custom_call.1} parent=47 // pred_check_branch
          %705 = sbr.rel (%p703) target = $region56
        $region55: #{tpu_custom_call.1} parent=47 // pred_region
          %s707 = ssub.s32 256, 256
          %708 = vsyncadd %s684, %s707
          %s709 = smul.addr %s26, 128
          %s710 = scalar_lea.hbm %s8, %s709
          %s711 = sshll.u32 %s687, 4
          %s712 = int_to_ptr.vmem [resolvable:$true] %s711
          %717 = dma.vmem_to_hbm [thread:$0]  %s712, 256, %s710, %s684, 128, 256, 8
        $region56: #{tpu_custom_call.1} parent=47 // pred_fallthru
          _
      $region48: #{tpu_custom_call.1} parent=5 // pred_fallthru
        _
      %p718 = scmp.le.s32.totalorder 2, %s21
      // Predicated region
      $region57: #{tpu_custom_call.1} parent=5 // pred_check
        %p719 = pneg %p718
      $region58: #{tpu_custom_call.1} parent=5 // pred_check_branch
        %721 = sbr.rel (%p719) target = $region60
      $region59: #{tpu_custom_call.1} parent=5 // pred_region
        %s722 = ssub.s32 %s21, 2
        // Predicated region
        $region61: #{tpu_custom_call.1} parent=59 // pred_check
          %p723 = pneg %p202
        $region62: #{tpu_custom_call.1} parent=59 // pred_check_branch
          %725 = sbr.rel (%p723) target = $region64
        $region63: #{tpu_custom_call.1} parent=59 // pred_region
          %s726 = sand.u32 %s187, 1
          %s727 = scalar_lea.sflag [#allocation3], %s726
          %s728 = sand.u32 %s187, 1
          %s729 = smul.addr %s728, 16
          %s730 = scalar_lea.vmem [#allocation2], %s729
          %731 = dma.done %s727, 256
        $region64: #{tpu_custom_call.1} parent=59 // pred_fallthru
          _
        // Predicated region
        $region65: #{tpu_custom_call.1} parent=59 // pred_check
          %p732 = pneg %p228
        $region66: #{tpu_custom_call.1} parent=59 // pred_check_branch
          %734 = sbr.rel (%p732) target = $region68
        $region67: #{tpu_custom_call.1} parent=59 // pred_region
          %s735 = sand.u32 %s213, 1
          %s736 = scalar_lea.sflag [#allocation5], %s735
          %s737 = sand.u32 %s213, 1
          %s738 = smul.addr %s737, 16
          %s739 = scalar_lea.vmem [#allocation4], %s738
          %740 = dma.done %s736, 256
        $region68: #{tpu_custom_call.1} parent=59 // pred_fallthru
          _
      $region60: #{tpu_custom_call.1} parent=5 // pred_fallthru
        _
    $region6: #{tpu_custom_call.1} parent=1 // loop_footer
      %s25 = sadd.s32 1, %s21
    $region7: #{tpu_custom_call.1} parent=1 // loop_footer_branch
      %20 = sbr.rel target = $region3
    $region8: #{tpu_custom_call.1} parent=1 // loop_exit
      _
    %741 = vsyncpa [#allocation3], 1
    %s742 = scalar_lea.sflag [#allocation3], 1
    %743 = vsyncpa %s742, 1
    %744 = vsyncpa [#allocation5], 1
    %s745 = scalar_lea.sflag [#allocation5], 1
    %746 = vsyncpa %s745, 1

// kernel: tpu_custom_call.1
$region0: #{tpu_custom_call.1}
  #allocation0 [shape = 'u32[]', space=smem, size = 0x4, offset = 0x4, fixed_abs, tag = 'smem constant byte address 0x4 - core index']
  #allocation1 [shape = 'u32[144,128]{1,0:T(1,128)}', space=vmem, size = 0x12000, scoped, tag = 'internal scratch']
  %s0 = inlined_call_operand.vmem [shape: bf16[256,64], index: 0, kind: input, shape index: {}]
  %s1 = inlined_call_operand.vmem [shape: bf16[32,64], index: 1, kind: input, shape index: {}]
  %s2 = inlined_call_operand.vmem [shape: f32[32,1], index: 2, kind: input, shape index: {}]
  %s3 = inlined_call_operand.vmem [shape: bf16[16,32], index: 3, kind: input, shape index: {}]
  %s4 = inlined_call_operand.vmem [shape: f32[16,1], index: 4, kind: input, shape index: {}]
  %s5 = inlined_call_operand.vmem [shape: bf16[10,16], index: 5, kind: input, shape index: {}]
  %s6 = inlined_call_operand.vmem [shape: f32[10,1], index: 6, kind: input, shape index: {}]
  %s7 = inlined_call_operand.hbm [shape: f32[16,256], index: 7, kind: output, shape index: {0}]
  %s8 = inlined_call_operand.hbm [shape: f32[10,256], index: 8, kind: output, shape index: {1}]
  %9 = xla_tuple %s7, %s8
  %s10 = sld [smem:[#allocation0]]
  $region69: #{tpu_custom_call.1} parent=0
    _
  %s12 = ssub.s32 1, %s10
  %s13 = scalar_select 0, %s12, %s10
  $region1: #{tpu_custom_call.1} parent=0
    #allocation2 [shape = 'u8[16384]{0}', space=vmem, size = 0x4000, scoped, tag = 'output window, operand 0']
    #allocation3 [shape = 's32[2]{0}', space=sflag, size = 0x8, scoped, tag = 'scoped memory for tpu_custom_call.1']
    #allocation4 [shape = 'u8[16384]{0}', space=vmem, size = 0x4000, scoped, tag = 'output window, operand 1']
    #allocation5 [shape = 's32[2]{0}', space=sflag, size = 0x8, scoped, tag = 'scoped memory for tpu_custom_call.1']
    %14 = vsyncpa [#allocation3], 0
    %s15 = scalar_lea.sflag [#allocation3], 1
    %16 = vsyncpa %s15, 0
    %17 = vsyncpa [#allocation5], 0
    %s18 = scalar_lea.sflag [#allocation5], 1
    %19 = vsyncpa %s18, 0
    loop: start=0, step=1, limit=4
    $region2: #{tpu_custom_call.1} parent=1 // loop_pre_header
      _
    $region3: #{tpu_custom_call.1} parent=1 // loop_header
      %s21 = sphi 0, %s25
      %p22 = scmp.ge.s32.totalorder %s21, 4
      %s31 = sphi 0, %s33
      %s34 = sphi 0, %s31
      %s35 = sphi 0, %s34
      %s51 = sphi 0, %s35
      %s55 = sphi 0, %s55
      %s57 = sphi 0, %s55
      %s58 = sphi 0, %s57
      %s72 = sphi 0, %s58
      %s76 = sphi 0, %s76
      %s78 = sphi 0, %s76
      %s79 = sphi 0, %s78
      %s93 = sphi 0, %s79
      %s97 = sphi 0, %s97
      %s99 = sphi 0, %s97
      %s100 = sphi 0, %s99
      %s114 = sphi 0, %s100
      %s118 = sphi 0, %s118
      %s120 = sphi 0, %s118
      %s121 = sphi 0, %s120
      %s135 = sphi 0, %s121
      %s139 = sphi 0, %s139
      %s141 = sphi 0, %s139
      %s142 = sphi 0, %s141
      %s156 = sphi 0, %s142
      %s160 = sphi 0, %s160
      %s162 = sphi 0, %s160
      %s163 = sphi 0, %s162
      %s177 = sphi 0, %s163
      %s183 = sphi 0, %s185
      %s186 = sphi 0, %s183
      %s187 = sphi 0, %s186
      %s203 = sphi 0, %s187
      %s209 = sphi 0, %s211
      %s212 = sphi 0, %s209
      %s213 = sphi 0, %s212
      %s229 = sphi 0, %s213
    $region4: #{tpu_custom_call.1} parent=1 // loop_header_branch
      %24 = sbr.rel (%p22) target = $region8
    $region5: #{tpu_custom_call.1} parent=1 // loop_body
      %s26 = ssub.s32 %s21, 1
      %s27 = ssub.s32 %s21, 2
      %s28 = sadd.s32 %s21, 1
      %s29 = ssub.s32 %s21, %s28
      %p30 = scmp.eq.s32.totalorder %s29, 0
      %s32 = sadd.s32 %s31, 1
      %s33 = scalar_select %p30, %s31, %s32
      %p36 = pneg %p30
      %p37 = scmp.eq.s32.totalorder %s21, 1
      %p38 = por %p36, %p37
      %p39 = scmp.ne.s32.totalorder %s31, %s34
      %p40 = scmp.eq.s32.totalorder %s21, 0
      %p41 = por %p39, %p40
      %p42 = scmp.ne.s32.totalorder %s31, %s34
      %p43 = scmp.eq.s32.totalorder %s26, 1
      %p44 = por %p42, %p43
      %p45 = scmp.ne.s32.totalorder %s34, %s35
      %p46 = scmp.eq.s32.totalorder %s26, 0
      %p47 = por %p45, %p46
      %p48 = scmp.ne.s32.totalorder %s34, %s35
      %p49 = scmp.eq.s32.totalorder %s27, 1
      %p50 = por %p48, %p49
      %p52 = scmp.ne.s32.totalorder %s35, %s51
      %p53 = scmp.eq.s32.totalorder %s27, 0
      %p54 = por %p52, %p53
      %s56 = sadd.s32 %s55, 1
      %p59 = scmp.eq.s32.totalorder %s21, 1
      %p60 = scmp.ne.s32.totalorder %s55, %s57
      %p61 = scmp.eq.s32.totalorder %s21, 0
      %p62 = por %p60, %p61
      %p63 = scmp.ne.s32.totalorder %s55, %s57
      %p64 = scmp.eq.s32.totalorder %s26, 1
      %p65 = por %p63, %p64
      %p66 = scmp.ne.s32.totalorder %s57, %s58
      %p67 = scmp.eq.s32.totalorder %s26, 0
      %p68 = por %p66, %p67
      %p69 = scmp.ne.s32.totalorder %s57, %s58
      %p70 = scmp.eq.s32.totalorder %s27, 1
      %p71 = por %p69, %p70
      %p73 = scmp.ne.s32.totalorder %s58, %s72
      %p74 = scmp.eq.s32.totalorder %s27, 0
      %p75 = por %p73, %p74
      %s77 = sadd.s32 %s76, 1
      %p80 = scmp.eq.s32.totalorder %s21, 1
      %p81 = scmp.ne.s32.totalorder %s76, %s78
      %p82 = scmp.eq.s32.totalorder %s21, 0
      %p83 = por %p81, %p82
      %p84 = scmp.ne.s32.totalorder %s76, %s78
      %p85 = scmp.eq.s32.totalorder %s26, 1
      %p86 = por %p84, %p85
      %p87 = scmp.ne.s32.totalorder %s78, %s79
      %p88 = scmp.eq.s32.totalorder %s26, 0
      %p89 = por %p87, %p88
      %p90 = scmp.ne.s32.totalorder %s78, %s79
      %p91 = scmp.eq.s32.totalorder %s27, 1
      %p92 = por %p90, %p91
      %p94 = scmp.ne.s32.totalorder %s79, %s93
      %p95 = scmp.eq.s32.totalorder %s27, 0
      %p96 = por %p94, %p95
      %s98 = sadd.s32 %s97, 1
      %p101 = scmp.eq.s32.totalorder %s21, 1
      %p102 = scmp.ne.s32.totalorder %s97, %s99
      %p103 = scmp.eq.s32.totalorder %s21, 0
      %p104 = por %p102, %p103
      %p105 = scmp.ne.s32.totalorder %s97, %s99
      %p106 = scmp.eq.s32.totalorder %s26, 1
      %p107 = por %p105, %p106
      %p108 = scmp.ne.s32.totalorder %s99, %s100
      %p109 = scmp.eq.s32.totalorder %s26, 0
      %p110 = por %p108, %p109
      %p111 = scmp.ne.s32.totalorder %s99, %s100
      %p112 = scmp.eq.s32.totalorder %s27, 1
      %p113 = por %p111, %p112
      %p115 = scmp.ne.s32.totalorder %s100, %s114
      %p116 = scmp.eq.s32.totalorder %s27, 0
      %p117 = por %p115, %p116
      %s119 = sadd.s32 %s118, 1
      %p122 = scmp.eq.s32.totalorder %s21, 1
      %p123 = scmp.ne.s32.totalorder %s118, %s120
      %p124 = scmp.eq.s32.totalorder %s21, 0
      %p125 = por %p123, %p124
      %p126 = scmp.ne.s32.totalorder %s118, %s120
      %p127 = scmp.eq.s32.totalorder %s26, 1
      %p128 = por %p126, %p127
      %p129 = scmp.ne.s32.totalorder %s120, %s121
      %p130 = scmp.eq.s32.totalorder %s26, 0
      %p131 = por %p129, %p130
      %p132 = scmp.ne.s32.totalorder %s120, %s121
      %p133 = scmp.eq.s32.totalorder %s27, 1
      %p134 = por %p132, %p133
      %p136 = scmp.ne.s32.totalorder %s121, %s135
      %p137 = scmp.eq.s32.totalorder %s27, 0
      %p138 = por %p136, %p137
      %s140 = sadd.s32 %s139, 1
      %p143 = scmp.eq.s32.totalorder %s21, 1
      %p144 = scmp.ne.s32.totalorder %s139, %s141
      %p145 = scmp.eq.s32.totalorder %s21, 0
      %p146 = por %p144, %p145
      %p147 = scmp.ne.s32.totalorder %s139, %s141
      %p148 = scmp.eq.s32.totalorder %s26, 1
      %p149 = por %p147, %p148
      %p150 = scmp.ne.s32.totalorder %s141, %s142
      %p151 = scmp.eq.s32.totalorder %s26, 0
      %p152 = por %p150, %p151
      %p153 = scmp.ne.s32.totalorder %s141, %s142
      %p154 = scmp.eq.s32.totalorder %s27, 1
      %p155 = por %p153, %p154
      %p157 = scmp.ne.s32.totalorder %s142, %s156
      %p158 = scmp.eq.s32.totalorder %s27, 0
      %p159 = por %p157, %p158
      %s161 = sadd.s32 %s160, 1
      %p164 = scmp.eq.s32.totalorder %s21, 1
      %p165 = scmp.ne.s32.totalorder %s160, %s162
      %p166 = scmp.eq.s32.totalorder %s21, 0
      %p167 = por %p165, %p166
      %p168 = scmp.ne.s32.totalorder %s160, %s162
      %p169 = scmp.eq.s32.totalorder %s26, 1
      %p170 = por %p168, %p169
      %p171 = scmp.ne.s32.totalorder %s162, %s163
      %p172 = scmp.eq.s32.totalorder %s26, 0
      %p173 = por %p171, %p172
      %p174 = scmp.ne.s32.totalorder %s162, %s163
      %p175 = scmp.eq.s32.totalorder %s27, 1
      %p176 = por %p174, %p175
      %p178 = scmp.ne.s32.totalorder %s163, %s177
      %p179 = scmp.eq.s32.totalorder %s27, 0
      %p180 = por %p178, %p179
      %s181 = ssub.s32 %s21, %s28
      %p182 = scmp.eq.s32.totalorder %s181, 0
      %s184 = sadd.s32 %s183, 1
      %s185 = scalar_select %p182, %s183, %s184
      %p188 = pneg %p182
      %p189 = scmp.eq.s32.totalorder %s21, 1
      %p190 = por %p188, %p189
      %p191 = scmp.ne.s32.totalorder %s183, %s186
      %p192 = scmp.eq.s32.totalorder %s21, 0
      %p193 = por %p191, %p192
      %p194 = scmp.ne.s32.totalorder %s183, %s186
      %p195 = scmp.eq.s32.totalorder %s26, 1
      %p196 = por %p194, %p195
      %p197 = scmp.ne.s32.totalorder %s186, %s187
      %p198 = scmp.eq.s32.totalorder %s26, 0
      %p199 = por %p197, %p198
      %p200 = scmp.ne.s32.totalorder %s186, %s187
      %p201 = scmp.eq.s32.totalorder %s27, 1
      %p202 = por %p200, %p201
      %p204 = scmp.ne.s32.totalorder %s187, %s203
      %p205 = scmp.eq.s32.totalorder %s27, 0
      %p206 = por %p204, %p205
      %s207 = ssub.s32 %s21, %s28
      %p208 = scmp.eq.s32.totalorder %s207, 0
      %s210 = sadd.s32 %s209, 1
      %s211 = scalar_select %p208, %s209, %s210
      %p214 = pneg %p208
      %p215 = scmp.eq.s32.totalorder %s21, 1
      %p216 = por %p214, %p215
      %p217 = scmp.ne.s32.totalorder %s209, %s212
      %p218 = scmp.eq.s32.totalorder %s21, 0
      %p219 = por %p217, %p218
      %p220 = scmp.ne.s32.totalorder %s209, %s212
      %p221 = scmp.eq.s32.totalorder %s26, 1
      %p222 = por %p220, %p221
      %p223 = scmp.ne.s32.totalorder %s212, %s213
      %p224 = scmp.eq.s32.totalorder %s26, 0
      %p225 = por %p223, %p224
      %p226 = scmp.ne.s32.totalorder %s212, %s213
      %p227 = scmp.eq.s32.totalorder %s27, 1
      %p228 = por %p226, %p227
      %p230 = scmp.ne.s32.totalorder %s213, %s229
      %p231 = scmp.eq.s32.totalorder %s27, 0
      %p232 = por %p230, %p231
      %p233 = scmp.le.s32.totalorder 1, %s21
      %p234 = scmp.lt.s32.totalorder %s21, 3
      %p235 = pnand %p233, %p234
      %p236 = pneg %p235
      // Predicated region
      $region9: #{tpu_custom_call.1} parent=5 // pred_check
        _
      $region10: #{tpu_custom_call.1} parent=5 // pred_check_branch
        %238 = sbr.rel (%p235) target = $region12
      $region11: #{tpu_custom_call.1} parent=5 // pred_region
        %s239 = ssub.s32 %s21, 1
        // Predicated region
        $region13: #{tpu_custom_call.1} parent=11 // pred_check
          %p240 = pneg %p68
        $region14: #{tpu_custom_call.1} parent=11 // pred_check_branch
          %242 = sbr.rel (%p240) target = $region16
        $region15: #{tpu_custom_call.1} parent=11 // pred_region
          _
        $region16: #{tpu_custom_call.1} parent=11 // pred_fallthru
          _
        // Predicated region
        $region17: #{tpu_custom_call.1} parent=11 // pred_check
          %p243 = pneg %p89
        $region18: #{tpu_custom_call.1} parent=11 // pred_check_branch
          %245 = sbr.rel (%p243) target = $region20
        $region19: #{tpu_custom_call.1} parent=11 // pred_region
          _
        $region20: #{tpu_custom_call.1} parent=11 // pred_fallthru
          _
        // Predicated region
        $region21: #{tpu_custom_call.1} parent=11 // pred_check
          %p246 = pneg %p110
        $region22: #{tpu_custom_call.1} parent=11 // pred_check_branch
          %248 = sbr.rel (%p246) target = $region24
        $region23: #{tpu_custom_call.1} parent=11 // pred_region
          _
        $region24: #{tpu_custom_call.1} parent=11 // pred_fallthru
          _
        // Predicated region
        $region25: #{tpu_custom_call.1} parent=11 // pred_check
          %p249 = pneg %p131
        $region26: #{tpu_custom_call.1} parent=11 // pred_check_branch
          %251 = sbr.rel (%p249) target = $region28
        $region27: #{tpu_custom_call.1} parent=11 // pred_region
          _
        $region28: #{tpu_custom_call.1} parent=11 // pred_fallthru
          _
        // Predicated region
        $region29: #{tpu_custom_call.1} parent=11 // pred_check
          %p252 = pneg %p152
        $region30: #{tpu_custom_call.1} parent=11 // pred_check_branch
          %254 = sbr.rel (%p252) target = $region32
        $region31: #{tpu_custom_call.1} parent=11 // pred_region
          _
        $region32: #{tpu_custom_call.1} parent=11 // pred_fallthru
          _
        // Predicated region
        $region33: #{tpu_custom_call.1} parent=11 // pred_check
          %p255 = pneg %p173
        $region34: #{tpu_custom_call.1} parent=11 // pred_check_branch
          %257 = sbr.rel (%p255) target = $region36
        $region35: #{tpu_custom_call.1} parent=11 // pred_region
          _
        $region36: #{tpu_custom_call.1} parent=11 // pred_fallthru
          _
      $region12: #{tpu_custom_call.1} parent=5 // pred_fallthru
        _
      %p258 = scmp.lt.s32.totalorder %s21, 2
      // Predicated region
      $region37: #{tpu_custom_call.1} parent=5 // pred_check
        %p259 = pneg %p258
      $region38: #{tpu_custom_call.1} parent=5 // pred_check_branch
        %261 = sbr.rel (%p259) target = $region40
      $region39: #{tpu_custom_call.1} parent=5 // pred_region
        // Predicated region
        $region41: #{tpu_custom_call.1} parent=39 // pred_check
          %p262 = pneg %p41
        $region42: #{tpu_custom_call.1} parent=39 // pred_check_branch
          %264 = sbr.rel (%p262) target = $region44
        $region43: #{tpu_custom_call.1} parent=39 // pred_region
          %s265 = smul.u32 16, %s21
          %p266 = scmp.lt.s32.totalorder %s265, 31
          %s267 = scalar_select %p266, %s265, 31
          %s268 = smul.addr %s267, 4
          %s269 = scalar_lea.vmem %s0, %s268
          %s270 = smul.u32 16, %s21
        $region44: #{tpu_custom_call.1} parent=39 // pred_fallthru
          _
      $region40: #{tpu_custom_call.1} parent=5 // pred_fallthru
        _
      %p271 = scmp.le.s32.totalorder 1, %s21
      %p272 = scmp.lt.s32.totalorder %s21, 3
      %p273 = pnand %p271, %p272
      %p274 = pneg %p273
      // Predicated region
      $region45: #{tpu_custom_call.1} parent=5 // pred_check
        _
      $region46: #{tpu_custom_call.1} parent=5 // pred_check_branch
        %276 = sbr.rel (%p273) target = $region48
      $region47: #{tpu_custom_call.1} parent=5 // pred_region
        %s277 = ssub.s32 %s21, 1
        %s278 = smul.u32 16, %s26
        %p279 = scmp.lt.s32.totalorder %s278, 31
        %s280 = scalar_select %p279, %s278, 31
        %s281 = smul.addr %s280, 4
        %s282 = scalar_lea.vmem %s0, %s281
        %p283 = pneg %p47
        %p284 = pneg %p44
        %p285 = pneg %p68
        %p286 = pneg %p65
        %p287 = pneg %p89
        %p288 = pneg %p86
        %p289 = pneg %p110
        %p290 = pneg %p107
        %p291 = pneg %p131
        %p292 = pneg %p128
        %p293 = pneg %p152
        %p294 = pneg %p149
        %p295 = pneg %p173
        %p296 = pneg %p170
        %p297 = pneg %p199
        %p298 = pneg %p196
        %s299 = sand.u32 %s186, 1
        %s300 = scalar_lea.sflag [#allocation3], %s299
        %s301 = sand.u32 %s186, 1
        %s302 = smul.addr %s301, 16
        %s303 = scalar_lea.vmem [#allocation2], %s302
        %p304 = pneg %p225
        %p305 = pneg %p222
        %s306 = sand.u32 %s212, 1
        %s307 = scalar_lea.sflag [#allocation5], %s306
        %s308 = sand.u32 %s212, 1
        %s309 = smul.addr %s308, 16
        %s310 = scalar_lea.vmem [#allocation4], %s309
        %s311 = smul.u32 16, %s26
        %p312 = scmp.lt.s32.totalorder %s311, 31
        %s313 = scalar_select %p312, %s311, 31
        %s314 = smul.addr %s313, 4
        %s315 = scalar_lea.vmem %s0, %s314
        %s316 = smul.u32 16, %s26
        %v318 = vld [vmem:[%s1] sm:$0xf]
        %v319 = vld [vmem:[%s1 + $0x4] sm:$0xf]
        %v320 = vld [vmem:[%s1 + $0x8] sm:$0xf]
        %v321 = vld [vmem:[%s1 + $0xc] sm:$0xf]
        %v322 = vld [vmem:[%s315] sm:$0xf]
        %v323 = vld [vmem:[%s315 + $0x4] sm:$0xf]
        %v324 = vld [vmem:[%s315 + $0x8] sm:$0xf]
        %v325 = vld [vmem:[%s315 + $0xc] sm:$0xf]
        %v326 = vld [vmem:[%s315 + $0x10] sm:$0xf]
        %v327 = vld [vmem:[%s315 + $0x14] sm:$0xf]
        %v328 = vld [vmem:[%s315 + $0x18] sm:$0xf]
        %v329 = vld [vmem:[%s315 + $0x1c] sm:$0xf]
        %v330 = vld [vmem:[%s315 + $0x20] sm:$0xf]
        %v331 = vld [vmem:[%s315 + $0x24] sm:$0xf]
        %v332 = vld [vmem:[%s315 + $0x28] sm:$0xf]
        %v333 = vld [vmem:[%s315 + $0x2c] sm:$0xf]
        %v334 = vld [vmem:[%s315 + $0x30] sm:$0xf]
        %v335 = vld [vmem:[%s315 + $0x34] sm:$0xf]
        %v336 = vld [vmem:[%s315 + $0x38] sm:$0xf]
        %v337 = vld [vmem:[%s315 + $0x3c] sm:$0xf]
        %v338 = vld [vmem:[%s2] sm:$0xff]
        %v339 = vld [vmem:[%s2 + $0x8] sm:$0xff]
        %v340 = vld [vmem:[%s2 + $0x10] sm:$0xff]
        %v341 = vld [vmem:[%s2 + $0x18] sm:$0xff]
        %343 = vset.pattern.permute.xlu0 0
        %344 = vperm.xlu0 %343, %v338
        %v345 = vpop.permute.xlu0 %344
        %348 = vset.pattern.permute.xlu0 0
        %349 = vperm.xlu0 %348, %v339
        %v350 = vpop.permute.xlu0 %349
        %353 = vset.pattern.permute.xlu0 0
        %354 = vperm.xlu0 %353, %v340
        %v355 = vpop.permute.xlu0 %354
        %358 = vset.pattern.permute.xlu0 0
        %359 = vperm.xlu0 %358, %v341
        %v360 = vpop.permute.xlu0 %359
        %v366 = vunpack.c.l.b16 %v318
        %v367 = vunpack.c.l.b16 %v319
        %v368 = vunpack.c.l.b16 %v320
        %v369 = vunpack.c.l.b16 %v321
        %v370 = vpack.c.b16 %v367, %v366
        %v371 = vpack.c.b16 %v369, %v368
        %v388 = vunpack.c.l.b16 %v322
        %v389 = vunpack.c.l.b16 %v323
        %v390 = vunpack.c.l.b16 %v324
        %v391 = vunpack.c.l.b16 %v325
        %v392 = vunpack.c.l.b16 %v326
        %v393 = vunpack.c.l.b16 %v327
        %v394 = vunpack.c.l.b16 %v328
        %v395 = vunpack.c.l.b16 %v329
        %v396 = vunpack.c.l.b16 %v330
        %v397 = vunpack.c.l.b16 %v331
        %v398 = vunpack.c.l.b16 %v332
        %v399 = vunpack.c.l.b16 %v333
        %v400 = vunpack.c.l.b16 %v334
        %v401 = vunpack.c.l.b16 %v335
        %v402 = vunpack.c.l.b16 %v336
        %v403 = vunpack.c.l.b16 %v337
        %v404 = vpack.c.b16 %v389, %v388
        %v405 = vpack.c.b16 %v391, %v390
        %v406 = vpack.c.b16 %v393, %v392
        %v407 = vpack.c.b16 %v395, %v394
        %v408 = vpack.c.b16 %v397, %v396
        %v409 = vpack.c.b16 %v399, %v398
        %v410 = vpack.c.b16 %v401, %v400
        %v411 = vpack.c.b16 %v403, %v402
        %vm412 = vcmask 523264
        %v414 = vsel %vm412, %v370, 0
        %v417 = vsel %vm412, %v371, 0
        %v420 = vsel %vm412, %v404, 0
        %v423 = vsel %vm412, %v405, 0
        %v426 = vsel %vm412, %v406, 0
        %v429 = vsel %vm412, %v407, 0
        %v432 = vsel %vm412, %v408, 0
        %v435 = vsel %vm412, %v409, 0
        %v438 = vsel %vm412, %v410, 0
        %v441 = vsel %vm412, %v411, 0
        %443 = vmatprep.subr.bf16.mxu0 0
        %444 = vmatpush1.bf16.xpose.msra.mxu0 %v420
        %445 = vmatprep.subr.bf16.mxu0 0
        %446 = vmatpush1.bf16.xpose.msra.mxu0 %v423
        %447 = vmatprep.subr.bf16.mxu0 0
        %448 = vmatpush1.bf16.xpose.msra.mxu0 %v426
        %449 = vmatprep.subr.bf16.mxu0 0
        %450 = vmatpush1.bf16.xpose.msra.mxu0 %v429
        %451 = vmatprep.subr.bf16.mxu0 0
        %452 = vmatpush1.bf16.xpose.msra.mxu0 %v432
        %453 = vmatprep.subr.bf16.mxu0 0
        %454 = vmatpush1.bf16.xpose.msra.mxu0 %v435
        %455 = vmatprep.subr.bf16.mxu0 0
        %456 = vmatpush1.bf16.xpose.msra.mxu0 %v438
        %457 = vmatprep.subr.bf16.mxu0 0
        %458 = vmatpush1.bf16.xpose.msra.mxu0 %v441
        %459 = vmatprep.subr.bf16.mxu0 0
        %460 = vmatpush1.bf16.xpose.msra.mxu0 0
        %461 = vmatprep.subr.bf16.mxu0 0
        %462 = vmatpush1.bf16.xpose.msra.mxu0 0
        %463 = vmatprep.subr.bf16.mxu0 0
        %464 = vmatpush1.bf16.xpose.msra.mxu0 0
        %465 = vmatprep.subr.bf16.mxu0 0
        %466 = vmatpush1.bf16.xpose.msra.mxu0 0
        %467 = vmatprep.subr.bf16.mxu0 0
        %468 = vmatpush1.bf16.xpose.msra.mxu0 0
        %469 = vmatprep.subr.bf16.mxu0 0
        %470 = vmatpush1.bf16.xpose.msra.mxu0 0
        %471 = vmatprep.subr.bf16.mxu0 0
        %472 = vmatpush1.bf16.xpose.msra.mxu0 0
        %473 = vmatprep.subr.bf16.mxu0 0
        %474 = vmatpush1.bf16.xpose.msra.mxu0 0
        %475 = vmatprep.mubr.bf16.mxu0 0
        %476 = vmatmul.mubr.bf16.gmra.mrb[0].mxu0 %v414
        %v477 = vpop.f32.mrb[0].mxu0
        %v478 = vadd.f32 %v345, %v477
        %v479 = vpop.f32.mrb[0].mxu0
        %v480 = vpop.f32.mrb[0].mxu0
        %v481 = vadd.f32 %v350, %v480
        %v482 = vpop.f32.mrb[0].mxu0
        %483 = vmatprep.mubr.bf16.mxu0 0
        %484 = vmatmul.mubr.bf16.gmra.mrb[0].mxu0 %v417
        %v485 = vpop.f32.mrb[0].mxu0
        %v486 = vadd.f32 %v355, %v485
        %v487 = vpop.f32.mrb[0].mxu0
        %v488 = vpop.f32.mrb[0].mxu0
        %v489 = vadd.f32 %v360, %v488
        %v490 = vpop.f32.mrb[0].mxu0
        %491 = vdwg.mxu0
        %v492 = vmax.f32 %v478, 0.0
        %v493 = vmax.f32 %v481, 0.0
        %v494 = vmax.f32 %v486, 0.0
        %v495 = vmax.f32 %v489, 0.0
        %v496 = vld [vmem:[%s3] sm:$0xf]
        %v497 = vld [vmem:[%s3 + $0x4] sm:$0xf]
        %v498 = vpack.c.bf16 %v493, %v492
        %v499 = vpack.c.bf16 %v495, %v494
        %v500 = vld [vmem:[%s4] sm:$0xff]
        %v501 = vld [vmem:[%s4 + $0x8] sm:$0xff]
        %503 = vset.pattern.permute.xlu0 0
        %504 = vperm.xlu0 %503, %v500
        %v505 = vpop.permute.xlu0 %504
        %508 = vset.pattern.permute.xlu0 0
        %509 = vperm.xlu0 %508, %v501
        %v510 = vpop.permute.xlu0 %509
        %v514 = vunpack.c.l.b16 %v496
        %v515 = vunpack.c.l.b16 %v497
        %v516 = vpack.c.b16 %v515, %v514
        %vm517 = vcmask 261120
        %v519 = vsel %vm517, %v516, 0
        %521 = vmatprep.subr.bf16.mxu0 0
        %522 = vmatpush1.bf16.msra.mxu0 %v498
        %523 = vmatprep.subr.bf16.mxu0 0
        %524 = vmatpush1.bf16.msra.mxu0 %v499
        %525 = vmatprep.subr.bf16.mxu0 0
        %526 = vmatpush1.bf16.msra.mxu0 0
        %527 = vmatprep.subr.bf16.mxu0 0
        %528 = vmatpush1.bf16.msra.mxu0 0
        %529 = vmatprep.subr.bf16.mxu0 0
        %530 = vmatpush1.bf16.msra.mxu0 0
        %531 = vmatprep.subr.bf16.mxu0 0
        %532 = vmatpush1.bf16.msra.mxu0 0
        %533 = vmatprep.subr.bf16.mxu0 0
        %534 = vmatpush1.bf16.msra.mxu0 0
        %535 = vmatprep.subr.bf16.mxu0 0
        %536 = vmatpush1.bf16.msra.mxu0 0
        %537 = vmatprep.subr.bf16.mxu0 0
        %538 = vmatpush1.bf16.msra.mxu0 0
        %539 = vmatprep.subr.bf16.mxu0 0
        %540 = vmatpush1.bf16.msra.mxu0 0
        %541 = vmatprep.subr.bf16.mxu0 0
        %542 = vmatpush1.bf16.msra.mxu0 0
        %543 = vmatprep.subr.bf16.mxu0 0
        %544 = vmatpush1.bf16.msra.mxu0 0
        %545 = vmatprep.subr.bf16.mxu0 0
        %546 = vmatpush1.bf16.msra.mxu0 0
        %547 = vmatprep.subr.bf16.mxu0 0
        %548 = vmatpush1.bf16.msra.mxu0 0
        %549 = vmatprep.subr.bf16.mxu0 0
        %550 = vmatpush1.bf16.msra.mxu0 0
        %551 = vmatprep.subr.bf16.mxu0 0
        %552 = vmatpush1.bf16.msra.mxu0 0
        %553 = vmatprep.mubr.bf16.mxu0 0
        %554 = vmatmul.mubr.bf16.gmra.mrb[0].mxu0 %v519
        %v555 = vpop.f32.mrb[0].mxu0
        %v556 = vadd.f32 %v505, %v555
        %v557 = vpop.f32.mrb[0].mxu0
        %v558 = vpop.f32.mrb[0].mxu0
        %v559 = vadd.f32 %v510, %v558
        %v560 = vpop.f32.mrb[0].mxu0
        %561 = vdwg.mxu0
        %562 = vst [vmem:[%s303] sm:$0xff] %v556
        %563 = vst [vmem:[%s303 + $0x8] sm:$0xff] %v559
        %v564 = vmul.f32 %v556, %v556
        %v565 = vmul.f32 %v559, %v559
        %v566 = vadd.f32 %v564, %v565
        %v567 = vrot.slane %v566, 4
        %v568 = vadd.f32 %v566, %v567
        %v569 = vrot.slane %v568, 2
        %v570 = vadd.f32 %v568, %v569
        %v571 = vrot.slane %v570, 1
        %v572 = vadd.f32 %v570, %v571
        %v573 = vld [vmem:[%s5] sm:$0xf]
        %v574 = vld [vmem:[%s5 + $0x4] sm:$0x1]
        %v575 = vpack.c.bf16 %v559, %v556
        %v578 = vunpack.c.l.b16 %v573
        %v579 = vunpack.c.l.b16 %v574
        %v580 = vpack.c.b16 %v579, %v578
        %vm581 = vcmask 130048
        %v583 = vsel %vm581, %v580, 0
        %585 = vmatprep.subr.bf16.mxu0 0
        %586 = vmatpush1.bf16.msra.mxu0 %v575
        %587 = vmatprep.subr.bf16.mxu0 0
        %588 = vmatpush1.bf16.msra.mxu0 0
        %589 = vmatprep.subr.bf16.mxu0 0
        %590 = vmatpush1.bf16.msra.mxu0 0
        %591 = vmatprep.subr.bf16.mxu0 0
        %592 = vmatpush1.bf16.msra.mxu0 0
        %593 = vmatprep.subr.bf16.mxu0 0
        %594 = vmatpush1.bf16.msra.mxu0 0
        %595 = vmatprep.subr.bf16.mxu0 0
        %596 = vmatpush1.bf16.msra.mxu0 0
        %597 = vmatprep.subr.bf16.mxu0 0
        %598 = vmatpush1.bf16.msra.mxu0 0
        %599 = vmatprep.subr.bf16.mxu0 0
        %600 = vmatpush1.bf16.msra.mxu0 0
        %601 = vmatprep.subr.bf16.mxu0 0
        %602 = vmatpush1.bf16.msra.mxu0 0
        %603 = vmatprep.subr.bf16.mxu0 0
        %604 = vmatpush1.bf16.msra.mxu0 0
        %605 = vmatprep.subr.bf16.mxu0 0
        %606 = vmatpush1.bf16.msra.mxu0 0
        %607 = vmatprep.subr.bf16.mxu0 0
        %608 = vmatpush1.bf16.msra.mxu0 0
        %609 = vmatprep.subr.bf16.mxu0 0
        %610 = vmatpush1.bf16.msra.mxu0 0
        %611 = vmatprep.subr.bf16.mxu0 0
        %612 = vmatpush1.bf16.msra.mxu0 0
        %613 = vmatprep.subr.bf16.mxu0 0
        %614 = vmatpush1.bf16.msra.mxu0 0
        %615 = vmatprep.subr.bf16.mxu0 0
        %616 = vmatpush1.bf16.msra.mxu0 0
        %617 = vmatprep.mubr.bf16.mxu0 0
        %618 = vmatmul.mubr.bf16.gmra.mrb[0].mxu0 %v583
        %v619 = vpop.f32.mrb[0].mxu0
        %v620 = vadd.f32 0.0, %v619
        %v621 = vpop.f32.mrb[0].mxu0
        %v622 = vpop.f32.mrb[0].mxu0
        %v623 = vadd.f32 0.0, %v622
        %v624 = vpop.f32.mrb[0].mxu0
        %625 = vdwg.mxu0
        %v626 = vld [vmem:[%s6] sm:$0xff]
        %v627 = vld [vmem:[%s6 + $0x8] sm:$0x3]
        %629 = vset.pattern.permute.xlu0 0
        %630 = vperm.xlu0 %629, %v626
        %v631 = vpop.permute.xlu0 %630
        %634 = vset.pattern.permute.xlu0 0
        %635 = vperm.xlu0 %634, %v627
        %v636 = vpop.permute.xlu0 %635
        %v638 = vadd.f32 %v631, %v572
        %v639 = vadd.f32 %v636, %v572
        %v640 = vadd.f32 %v638, %v620
        %v641 = vadd.f32 %v639, %v623
        %v642 = vmax.f32 %v640, 0.0
        %v643 = vmax.f32 %v641, 0.0
        %v644 = vadd.f32 %v642, 1.0
        %v645 = vadd.f32 %v643, 1.0
        %v646 = vrcp.pop %v644
        %v647 = vrcp.pop %v645
        %v648 = vrsqrt.pop %v646
        %v649 = vmul.f32 %v646, %v648
        %vm650 = vcmp.eq.f32.partialorder %v646, inf
        %v651 = vsel %vm650, %v646, %v649
        %vm652 = vcmp.eq.f32.partialorder %v646, 0.0
        %v653 = vand.u32 %v646, 2147483648
        %v654 = vsel %vm652, %v653, %v651
        %v655 = vrsqrt.pop %v647
        %v656 = vmul.f32 %v647, %v655
        %vm657 = vcmp.eq.f32.partialorder %v647, inf
        %v658 = vsel %vm657, %v647, %v656
        %vm659 = vcmp.eq.f32.partialorder %v647, 0.0
        %v660 = vand.u32 %v647, 2147483648
        %v661 = vsel %vm659, %v660, %v658
        %v662 = vmul.f32 %v646, %v654
        %v663 = vmul.f32 %v647, %v661
        %vm664 = vcmask 1041408
        %v665 = vsel %vm664, %v663, 0.0
        %v666 = vadd.f32 %v662, %v665
        %v667 = vrot.slane %v666, 4
        %v668 = vadd.f32 %v666, %v667
        %v669 = vrot.slane %v668, 2
        %v670 = vadd.f32 %v668, %v669
        %v671 = vrot.slane %v670, 1
        %v672 = vadd.f32 %v670, %v671
        %v673 = vrcp.pop %v672
        %v674 = vmul.f32 %v662, %v673
        %v675 = vmul.f32 %v663, %v673
        %676 = vst [vmem:[%s310] sm:$0xff] %v674
        %677 = vst [vmem:[%s310 + $0x8] sm:$0x3] %v675
        %s678 = sand.u32 %s186, 1
        %s679 = scalar_lea.sflag [#allocation3], %s678
        %s680 = sand.u32 %s186, 1
        %s681 = smul.addr %s680, 16
        %s682 = scalar_lea.vmem [#allocation2], %s681
        %s683 = sand.u32 %s212, 1
        %s684 = scalar_lea.sflag [#allocation5], %s683
        %s685 = sand.u32 %s212, 1
        %s686 = smul.addr %s685, 16
        %s687 = scalar_lea.vmem [#allocation4], %s686
        // Predicated region
        $region49: #{tpu_custom_call.1} parent=47 // pred_check
          %p688 = pneg %p196
        $region50: #{tpu_custom_call.1} parent=47 // pred_check_branch
          %690 = sbr.rel (%p688) target = $region52
        $region51: #{tpu_custom_call.1} parent=47 // pred_region
          %s692 = ssub.s32 256, 256
          %693 = vsyncadd %s679, %s692
          %s694 = smul.addr %s26, 128
          %s695 = scalar_lea.hbm %s7, %s694
          %s696 = sshll.u32 %s682, 4
          %s697 = int_to_ptr.vmem [resolvable:$true] %s696
          %702 = dma.vmem_to_hbm [thread:$0]  %s697, 256, %s695, %s679, 128, 256, 8
        $region52: #{tpu_custom_call.1} parent=47 // pred_fallthru
          _
        // Predicated region
        $region53: #{tpu_custom_call.1} parent=47 // pred_check
          %p703 = pneg %p222
        $region54: #{tpu_custom_call.1} parent=47 // pred_check_branch
          %705 = sbr.rel (%p703) target = $region56
        $region55: #{tpu_custom_call.1} parent=47 // pred_region
          %s707 = ssub.s32 256, 256
          %708 = vsyncadd %s684, %s707
          %s709 = smul.addr %s26, 128
          %s710 = scalar_lea.hbm %s8, %s709
          %s711 = sshll.u32 %s687, 4
          %s712 = int_to_ptr.vmem [resolvable:$true] %s711
          %717 = dma.vmem_to_hbm [thread:$0]  %s712, 256, %s710, %s684, 128, 256, 8
        $region56: #{tpu_custom_call.1} parent=47 // pred_fallthru
          _
      $region48: #{tpu_custom_call.1} parent=5 // pred_fallthru
        _
      %p718 = scmp.le.s32.totalorder 2, %s21
      // Predicated region
      $region57: #{tpu_custom_call.1} parent=5 // pred_check
        %p719 = pneg %p718
      $region58: #{tpu_custom_call.1} parent=5 // pred_check_branch
        %721 = sbr.rel (%p719) target = $region60
      $region59: #{tpu_custom_call.1} parent=5 // pred_region
        %s722 = ssub.s32 %s21, 2
        // Predicated region
        $region61: #{tpu_custom_call.1} parent=59 // pred_check
          %p723 = pneg %p202
        $region62: #{tpu_custom_call.1} parent=59 // pred_check_branch
          %725 = sbr.rel (%p723) target = $region64
        $region63: #{tpu_custom_call.1} parent=59 // pred_region
          %s726 = sand.u32 %s187, 1
          %s727 = scalar_lea.sflag [#allocation3], %s726
          %s728 = sand.u32 %s187, 1
          %s729 = smul.addr %s728, 16
          %s730 = scalar_lea.vmem [#allocation2], %s729
          %731 = dma.done %s727, 256
        $region64: #{tpu_custom_call.1} parent=59 // pred_fallthru
          _
        // Predicated region
        $region65: #{tpu_custom_call.1} parent=59 // pred_check
          %p732 = pneg %p228
        $region66: #{tpu_custom_call.1} parent=59 // pred_check_branch
          %734 = sbr.rel (%p732) target = $region68
        $region67: #{tpu_custom_call.1} parent=59 // pred_region
          %s735 = sand.u32 %s213, 1
          %s736 = scalar_lea.sflag [#allocation5], %s735
          %s737 = sand.u32 %s213, 1
          %s738 = smul.addr %s737, 16
          %s739 = scalar_lea.vmem [#allocation4], %s738
          %740 = dma.done %s736, 256
        $region68: #{tpu_custom_call.1} parent=59 // pred_fallthru
          _
      $region60: #{tpu_custom_call.1} parent=5 // pred_fallthru
        _
    $region6: #{tpu_custom_call.1} parent=1 // loop_footer
      %s25 = sadd.s32 1, %s21
    $region7: #{tpu_custom_call.1} parent=1 // loop_footer_branch
      %20 = sbr.rel target = $region3
    $region8: #{tpu_custom_call.1} parent=1 // loop_exit
      _
    %741 = vsyncpa [#allocation3], 1
    %s742 = scalar_lea.sflag [#allocation3], 1
    %743 = vsyncpa %s742, 1
    %744 = vsyncpa [#allocation5], 1
    %s745 = scalar_lea.sflag [#allocation5], 1
    %746 = vsyncpa %s745, 1

</llo_original>
